<compile_context>
chip_gen: v5e
topology: v5e:2x2
jax: 0.10.0
libtpu: 0.0.40
codegen_flags: <defaults>
</compile_context>

<pallas_src>
import functools

import jax
import jax.numpy as jnp
from jax.experimental import pallas as pl
from jax.experimental.pallas import tpu as pltpu


IN_FEATURES = 1920     # fixed by the module: nn.Linear(1920, 128 * param_num)
HEAD_WIDTH = 128       # each head reads a 128-wide slice of the hidden layer


def _tpu_kind():
    try:
        return jax.devices()[0].device_kind.lower()
    except Exception:
        return ""


def _is_v7(kind):
    return ("v7" in kind) or ("7x" in kind)


def _choose_heads_per_step(P, hs_cap):
    """Largest divisor of P that (a) keeps the buffered Wh slab within the VMEM
    budget (hs <= hs_cap) and (b) keeps n_steps >= 2 whenever P >= 2 so the
    'parallel' head axis can be sharded across v7x's two TensorCores."""
    min_steps = 2 if P >= 2 else 1
    best = 1
    for d in range(1, P + 1):
        if P % d == 0 and d <= hs_cap and P // d >= min_steps:
            best = d
    return best


def _metanet_kernel(heads_per_step, x_ref, wh_ref, bh_ref, hw_ref, hb_ref, out_ref):
    """One grid step = `heads_per_step` heads.

    x_ref : (B_pad, 1920)            bf16
    wh_ref: (1, 1920, 128*hs)        bf16   (one contiguous column slab of Wh)
    bh_ref: (1, 128*hs)              f32
    hw_ref: (hs, 128, 128)           bf16   (lane-padded head weights)
    hb_ref: (hs, 1, 128)             f32    (lane-padded head biases)
    out_ref:(B_pad, 128*hs)          f32
    """
    w = wh_ref[0]                                           # (1920, 128*hs)
    hidden = jnp.dot(x_ref[...], w, preferred_element_type=jnp.float32)
    hidden = jnp.maximum(hidden + bh_ref[...], 0.0)
    hidden_b = hidden.astype(hw_ref.dtype)

    # Per-head matmul on its 128-wide hidden slice (static, 128-aligned slices).
    for j in range(heads_per_step):
        h = hidden_b[:, j * HEAD_WIDTH:(j + 1) * HEAD_WIDTH]
        out_ref[:, j * HEAD_WIDTH:(j + 1) * HEAD_WIDTH] = (
            jnp.dot(h, hw_ref[j], preferred_element_type=jnp.float32) + hb_ref[j]
        )


def pack_metanet_params(wh, bh, head_weights, head_biases, *, heads_per_step=None):
    """Pack MetaNet parameters once (do this outside any timing loop).

    wh: (1920, 128*P) f32. bh: (1, 128*P) f32.
    head_weights[i]: (128, out_i) f32. head_biases[i]: (1, out_i) f32.
    """
    P = len(head_weights)
    param_sizes = tuple(int(w.shape[1]) for w in head_weights)
    # TODO(synk): heads with out_i > 128 would need an extra output-N tile axis.
    assert all(n <= HEAD_WIDTH for n in param_sizes)
    assert wh.shape == (IN_FEATURES, HEAD_WIDTH * P)

    kind = _tpu_kind()
    v7 = _is_v7(kind)
    # v7x: 64 MiB physical VMEM per TC -> cap hs ~8 and a 40 MiB scoped limit.
    # v5e/v6e: 128 MiB physical -> bigger slabs and a 64 MiB scoped limit.
    hs_cap = 8 if v7 else 16
    vmem_limit = (40 << 20) if v7 else (64 << 20)

    if heads_per_step is None:
        heads_per_step = _choose_heads_per_step(P, hs_cap)
    hs = heads_per_step
    assert P % hs == 0, (P, hs)
    # TODO(synk): for prime/odd P a dummy zero head could be appended so hs > 1.
    n_steps = P // hs

    # bf16 weights (bandwidth-bound kernel), f32 biases.
    wh_b = wh.astype(jnp.bfloat16)                            # (1920, 128*P)
    # Contiguous per-step slabs: (n_steps, 1920, 128*hs).
    wh_slabs = wh_b.reshape(IN_FEATURES, n_steps, HEAD_WIDTH * hs).transpose(1, 0, 2)
    bh_f = bh.astype(jnp.float32).reshape(1, HEAD_WIDTH * P)

    # Pack ragged heads: lane-pad each head's outputs to 128 and stack.
    hw = jnp.zeros((P, HEAD_WIDTH, HEAD_WIDTH), jnp.bfloat16)
    hb = jnp.zeros((P, 1, HEAD_WIDTH), jnp.float32)
    for i, (w, b) in enumerate(zip(head_weights, head_biases)):
        b2 = b.reshape(1, -1).astype(jnp.float32)
        hw = hw.at[i, :, :w.shape[1]].set(w.astype(jnp.bfloat16))
        hb = hb.at[i, :, :b2.shape[1]].set(b2)

    return dict(wh_slabs=wh_slabs, bh=bh_f, hw=hw, hb=hb,
                hs=hs, n_steps=n_steps, param_sizes=param_sizes,
                vmem_limit=vmem_limit)


def metanet_apply(packed, x):
    """x: (B, 1920) f32. Returns list of (B, out_i) f32 arrays (same semantics
    as MetaNet.forward, modulo bf16 weight/activation quantization)."""
    hs = packed["hs"]
    n_steps = packed["n_steps"]
    param_sizes = packed["param_sizes"]
    P = len(param_sizes)
    B = x.shape[0]

    # Pad batch to a multiple of 16 (bf16 sublane packing is (16,128)).
    # TODO(synk): if B ever grows large, add a second 'parallel' grid axis over
    # batch tiles so the x block and hidden stay bounded in VMEM.
    B_pad = max(16, -(-B // 16) * 16)
    x_p = jnp.zeros((B_pad, IN_FEATURES), jnp.bfloat16).at[:B].set(
        x.astype(jnp.bfloat16))

    kernel = functools.partial(_metanet_kernel, hs)

    # Wh slab spec: one contiguous (1920, 128*hs) slab per step; triple-buffer
    # the stream when there are enough steps to benefit from it.
    wh_block = (1, IN_FEATURES, HEAD_WIDTH * hs)
    wh_map = lambda i: (i, 0, 0)
    if n_steps >= 3:
        try:
            wh_spec = pl.BlockSpec(wh_block, wh_map, pipeline_mode=pl.Buffered(3))
        except TypeError:  # pipeline_mode not supported in this jax version
            wh_spec = pl.BlockSpec(wh_block, wh_map)
    else:
        wh_spec = pl.BlockSpec(wh_block, wh_map)

    flops = (2 * B_pad * IN_FEATURES * HEAD_WIDTH * P
             + 2 * B_pad * HEAD_WIDTH * HEAD_WIDTH * P)
    bytes_accessed = (x_p.size * 2 + packed["wh_slabs"].size * 2
                      + packed["bh"].size * 4 + packed["hw"].size * 2
                      + packed["hb"].size * 4 + B_pad * HEAD_WIDTH * P * 4)

    out = pl.pallas_call(
        kernel,
        out_shape=jax.ShapeDtypeStruct((B_pad, HEAD_WIDTH * P), jnp.float32),
        grid=(n_steps,),
        in_specs=[
            pl.BlockSpec((B_pad, IN_FEATURES), lambda i: (0, 0)),            # x (revisited)
            wh_spec,                                                          # Wh slab
            pl.BlockSpec((1, HEAD_WIDTH * hs), lambda i: (0, i)),            # bh cols
            pl.BlockSpec((hs, HEAD_WIDTH, HEAD_WIDTH), lambda i: (i, 0, 0)), # head W
            pl.BlockSpec((hs, 1, HEAD_WIDTH), lambda i: (i, 0, 0)),          # head b
        ],
        out_specs=pl.BlockSpec((B_pad, HEAD_WIDTH * hs), lambda i: (0, i)),
        compiler_params=pltpu.CompilerParams(
            dimension_semantics=("parallel",),
            vmem_limit_bytes=packed["vmem_limit"],
        ),
        cost_estimate=pl.CostEstimate(
            flops=flops, transcendentals=0, bytes_accessed=bytes_accessed),
    )(x_p, packed["wh_slabs"], packed["bh"], packed["hw"], packed["hb"])

    # Slice the lane-dense padded output back to the ragged head sizes.
    return [out[:B, i * HEAD_WIDTH:i * HEAD_WIDTH + n]
            for i, n in enumerate(param_sizes)]


def metanet_forward(x, wh, bh, head_weights, head_biases, *, heads_per_step=None):
    """Convenience wrapper (packs every call). For repeated calls, use
    pack_metanet_params(...) once + metanet_apply(packed, x)."""
    packed = pack_metanet_params(wh, bh, head_weights, head_biases,
                                 heads_per_step=heads_per_step)
    return metanet_apply(packed, x)


def _init_linear(key, in_f, out_f):
    """Deterministic PyTorch-Linear-style init: U(-1/sqrt(in), 1/sqrt(in)).
    Weight returned already transposed to (in_f, out_f); bias as (1, out_f)."""
    kw, kb = jax.random.split(key)
    bound = 1.0 / (in_f ** 0.5)
    w = jax.random.uniform(kw, (in_f, out_f), jnp.float32, -bound, bound)
    b = jax.random.uniform(kb, (1, out_f), jnp.float32, -bound, bound)
    return w, b


if __name__ == "__main__":
    # Synthetic param_dict: {filter_name: number_of_params_for_that_filter}
    param_dict = {"conv1": 64, "conv2": 32, "conv3": 16, "conv4": 8}
    P = len(param_dict)
    param_sizes = list(param_dict.values())

    key = jax.random.PRNGKey(0)
    k_x, k_h, *k_heads = jax.random.split(key, 2 + P)

    B = 2
    x = jax.random.normal(k_x, (B, IN_FEATURES), jnp.float32)

    wh, bh = _init_linear(k_h, IN_FEATURES, HEAD_WIDTH * P)
    head_weights, head_biases = [], []
    for i, n in enumerate(param_sizes):
        w, b = _init_linear(k_heads[i], HEAD_WIDTH, n)
        head_weights.append(w)
        head_biases.append(b)

    outs = metanet_forward(x, wh, bh, head_weights, head_biases)
    outs = jax.block_until_ready(outs)

    # Pure-JAX reference using the same bf16 weights/activations the kernel sees.
    x_b = x.astype(jnp.bfloat16)
    hidden_ref = jnp.maximum(
        jnp.dot(x_b, wh.astype(jnp.bfloat16),
                preferred_element_type=jnp.float32) + bh, 0.0)
    hidden_ref_b = hidden_ref.astype(jnp.bfloat16)
    for i, (w, b) in enumerate(zip(head_weights, head_biases)):
        ref = jnp.dot(hidden_ref_b[:, i * HEAD_WIDTH:(i + 1) * HEAD_WIDTH],
                      w.astype(jnp.bfloat16),
                      preferred_element_type=jnp.float32) + b
        assert outs[i].shape == (B, param_sizes[i]), outs[i].shape
        assert jnp.allclose(outs[i], ref, atol=1e-2, rtol=1e-2), f"head {i} mismatch"

    print("KERNEL_OK")
</pallas_src>

<mosaic_0001>
module attributes {stable_mosaic.version = 11 : i64} {
  func.func @_metanet_kernel(%arg0: i32, %arg1: memref<16x1920xbf16, #tpu.memory_space<vmem>>, %arg2: memref<1x1920x256xbf16, #tpu.memory_space<vmem>>, %arg3: memref<1x256xf32, #tpu.memory_space<vmem>>, %arg4: memref<2x128x128xbf16, #tpu.memory_space<vmem>>, %arg5: memref<2x1x128xf32, #tpu.memory_space<vmem>>, %arg6: memref<16x256xf32, #tpu.memory_space<vmem>>) attributes {dimension_semantics = [#tpu.dimension_semantics<parallel>], iteration_bounds = array<i64: 2>, scalar_prefetch = 0 : i64, scratch_operands = 0 : i64, tpu.core_type = #tpu.core_type<tc>, window_params = [{pipeline_mode = #tpu.pipeline_mode<synchronous>, transform_indices = @transform_0, window_bounds = array<i64: 16, 1920>}, {transform_indices = @transform_1, window_bounds = array<i64: 1, 1920, 256>}, {transform_indices = @transform_2, window_bounds = array<i64: 1, 256>}, {transform_indices = @transform_3, window_bounds = array<i64: 2, 128, 128>}, {transform_indices = @transform_4, window_bounds = array<i64: 2, 1, 128>}, {transform_indices = @transform_5, window_bounds = array<i64: 16, 256>}]} {
    %c0 = arith.constant 0 : index
    %c0_0 = arith.constant 0 : index
    %c0_1 = arith.constant 0 : index
    %0 = vector.load %arg2[%c0, %c0_0, %c0_1] : memref<1x1920x256xbf16, #tpu.memory_space<vmem>>, vector<1x1920x256xbf16>
    %1 = vector.shape_cast %0 : vector<1x1920x256xbf16> to vector<1920x256xbf16>
    %c0_2 = arith.constant 0 : index
    %c0_3 = arith.constant 0 : index
    %2 = vector.load %arg1[%c0_2, %c0_3] : memref<16x1920xbf16, #tpu.memory_space<vmem>>, vector<16x1920xbf16>
    %cst = arith.constant dense<0.000000e+00> : vector<16x256xf32>
    %3 = tpu.matmul %2, %1, %cst {dimension_numbers = #tpu.dot_dimension_numbers<[1], [0], [0], [1], [0, 0, 1, 1], [], []>} : vector<16x1920xbf16>, vector<1920x256xbf16>, vector<16x256xf32> -> vector<16x256xf32>
    %c0_4 = arith.constant 0 : index
    %c0_5 = arith.constant 0 : index
    %4 = vector.load %arg3[%c0_4, %c0_5] : memref<1x256xf32, #tpu.memory_space<vmem>>, vector<1x256xf32>
    %5 = vector.broadcast %4 : vector<1x256xf32> to vector<16x256xf32>
    %6 = arith.addf %3, %5 : vector<16x256xf32>
    %cst_6 = arith.constant 0.000000e+00 : f32
    %7 = vector.broadcast %cst_6 : f32 to vector<16x256xf32>
    %8 = arith.maximumf %6, %7 : vector<16x256xf32>
    %9 = arith.truncf %8 : vector<16x256xf32> to vector<16x256xbf16>
    %10 = vector.extract_strided_slice %9 {offsets = [0, 0], sizes = [16, 128], strides = [1, 1]} : vector<16x256xbf16> to vector<16x128xbf16>
    %c0_7 = arith.constant 0 : index
    %c0_8 = arith.constant 0 : index
    %c0_9 = arith.constant 0 : index
    %11 = vector.load %arg4[%c0_7, %c0_8, %c0_9] : memref<2x128x128xbf16, #tpu.memory_space<vmem>>, vector<1x128x128xbf16>
    %12 = vector.shape_cast %11 : vector<1x128x128xbf16> to vector<128x128xbf16>
    %cst_10 = arith.constant dense<0.000000e+00> : vector<16x128xf32>
    %13 = tpu.matmul %10, %12, %cst_10 {dimension_numbers = #tpu.dot_dimension_numbers<[1], [0], [0], [1], [0, 0, 1, 1], [], []>} : vector<16x128xbf16>, vector<128x128xbf16>, vector<16x128xf32> -> vector<16x128xf32>
    %c0_11 = arith.constant 0 : index
    %c0_12 = arith.constant 0 : index
    %c0_13 = arith.constant 0 : index
    %14 = vector.load %arg5[%c0_11, %c0_12, %c0_13] : memref<2x1x128xf32, #tpu.memory_space<vmem>>, vector<1x1x128xf32>
    %15 = vector.shape_cast %14 : vector<1x1x128xf32> to vector<1x128xf32>
    %16 = vector.broadcast %15 : vector<1x128xf32> to vector<16x128xf32>
    %17 = arith.addf %13, %16 : vector<16x128xf32>
    %c0_14 = arith.constant 0 : index
    %c0_15 = arith.constant 0 : index
    %18 = vector.load %arg6[%c0_14, %c0_15] : memref<16x256xf32, #tpu.memory_space<vmem>>, vector<16x128xf32>
    tpu.vector_store %arg6[%c0_14, %c0_15], %17 {strides = array<i32>} : memref<16x256xf32, #tpu.memory_space<vmem>>, vector<16x128xf32>,
    %19 = vector.extract_strided_slice %9 {offsets = [0, 128], sizes = [16, 128], strides = [1, 1]} : vector<16x256xbf16> to vector<16x128xbf16>
    %c1 = arith.constant 1 : index
    %c0_16 = arith.constant 0 : index
    %c0_17 = arith.constant 0 : index
    %20 = vector.load %arg4[%c1, %c0_16, %c0_17] : memref<2x128x128xbf16, #tpu.memory_space<vmem>>, vector<1x128x128xbf16>
    %21 = vector.shape_cast %20 : vector<1x128x128xbf16> to vector<128x128xbf16>
    %cst_18 = arith.constant dense<0.000000e+00> : vector<16x128xf32>
    %22 = tpu.matmul %19, %21, %cst_18 {dimension_numbers = #tpu.dot_dimension_numbers<[1], [0], [0], [1], [0, 0, 1, 1], [], []>} : vector<16x128xbf16>, vector<128x128xbf16>, vector<16x128xf32> -> vector<16x128xf32>
    %c1_19 = arith.constant 1 : index
    %c0_20 = arith.constant 0 : index
    %c0_21 = arith.constant 0 : index
    %23 = vector.load %arg5[%c1_19, %c0_20, %c0_21] : memref<2x1x128xf32, #tpu.memory_space<vmem>>, vector<1x1x128xf32>
    %24 = vector.shape_cast %23 : vector<1x1x128xf32> to vector<1x128xf32>
    %25 = vector.broadcast %24 : vector<1x128xf32> to vector<16x128xf32>
    %26 = arith.addf %22, %25 : vector<16x128xf32>
    %c0_22 = arith.constant 0 : index
    %c128 = arith.constant 128 : index
    %27 = vector.load %arg6[%c0_22, %c128] : memref<16x256xf32, #tpu.memory_space<vmem>>, vector<16x128xf32>
    tpu.vector_store %arg6[%c0_22, %c128], %26 {strides = array<i32>} : memref<16x256xf32, #tpu.memory_space<vmem>>, vector<16x128xf32>,
    return
  }
  func.func @transform_0(%arg0: i32) -> (i32, i32) {
    %c0_i32 = arith.constant 0 : i32
    %c0_i32_0 = arith.constant 0 : i32
    %c0_i32_1 = arith.constant 0 : i32
    return %c0_i32, %c0_i32_0 : i32, i32
  }
  func.func @transform_1(%arg0: i32) -> (i32, i32, i32) {
    %c0_i32 = arith.constant 0 : i32
    %c0_i32_0 = arith.constant 0 : i32
    %c0_i32_1 = arith.constant 0 : i32
    return %arg0, %c0_i32, %c0_i32_0 : i32, i32, i32
  }
  func.func @transform_2(%arg0: i32) -> (i32, i32) {
    %c0_i32 = arith.constant 0 : i32
    %c0_i32_0 = arith.constant 0 : i32
    return %c0_i32, %arg0 : i32, i32
  }
  func.func @transform_3(%arg0: i32) -> (i32, i32, i32) {
    %c0_i32 = arith.constant 0 : i32
    %c0_i32_0 = arith.constant 0 : i32
    %c0_i32_1 = arith.constant 0 : i32
    return %arg0, %c0_i32, %c0_i32_0 : i32, i32, i32
  }
  func.func @transform_4(%arg0: i32) -> (i32, i32, i32) {
    %c0_i32 = arith.constant 0 : i32
    %c0_i32_0 = arith.constant 0 : i32
    %c0_i32_1 = arith.constant 0 : i32
    return %arg0, %c0_i32, %c0_i32_0 : i32, i32, i32
  }
  func.func @transform_5(%arg0: i32) -> (i32, i32) {
    %c0_i32 = arith.constant 0 : i32
    %c0_i32_0 = arith.constant 0 : i32
    return %c0_i32, %arg0 : i32, i32
  }
}

</mosaic_0001>

<llo_original>
// kernel: tpu_custom_call.1
$region0: #{tpu_custom_call.1}
  #allocation0 [shape = 'u32[]', space=smem, size = 0x4, offset = 0x4, fixed_abs, tag = 'smem constant byte address 0x4 - core index']
  #allocation1 [shape = 'u32[72,128]{1,0:T(1,128)}', space=vmem, size = 0x9000, scoped, tag = 'internal scratch']
  %s0 = inlined_call_operand.hbm [shape: bf16[16,1920], index: 0, kind: input, shape index: {}]
  %s1 = inlined_call_operand.hbm [shape: bf16[2,1920,256], index: 1, kind: input, shape index: {}]
  %s2 = inlined_call_operand.hbm [shape: f32[1,512], index: 2, kind: input, shape index: {}]
  %s3 = inlined_call_operand.hbm [shape: bf16[4,128,128], index: 3, kind: input, shape index: {}]
  %s4 = inlined_call_operand.hbm [shape: f32[4,1,128], index: 4, kind: input, shape index: {}]
  %s5 = inlined_call_operand.hbm [shape: f32[16,512], index: 5, kind: output, shape index: {}]
  %s6 = sld [smem:[#allocation0]]
  $region73: #{tpu_custom_call.1} parent=0
    _
  %s8 = ssub.s32 1, %s6
  %s9 = scalar_select 0, %s8, %s6
  $region1: #{tpu_custom_call.1} parent=0
    #allocation2 [shape = 'u8[61440]{0}', space=vmem, size = 0xf000, scoped, tag = 'input window, operand 0, single buffered']
    #allocation3 [shape = 's32[2]{0}', space=sflag, size = 0x8, scoped, tag = 'scoped memory for tpu_custom_call.1']
    #allocation4 [shape = 's32[2]{0}', space=sflag, size = 0x8, scoped, tag = 'scoped memory for tpu_custom_call.1']
    #allocation5 [shape = 'u8[1966080]{0}', space=vmem, size = 0x1e0000, scoped, tag = 'input window, operand 1']
    #allocation6 [shape = 's32[2]{0}', space=sflag, size = 0x8, scoped, tag = 'scoped memory for tpu_custom_call.1']
    #allocation7 [shape = 'u8[2048]{0}', space=vmem, size = 0x800, scoped, tag = 'input window, operand 2']
    #allocation8 [shape = 'u8[131072]{0}', space=vmem, size = 0x20000, scoped, tag = 'input window, operand 3']
    #allocation9 [shape = 's32[2]{0}', space=sflag, size = 0x8, scoped, tag = 'scoped memory for tpu_custom_call.1']
    #allocation10 [shape = 'u8[2048]{0}', space=vmem, size = 0x800, scoped, tag = 'input window, operand 4']
    #allocation11 [shape = 'u8[32768]{0}', space=vmem, size = 0x8000, scoped, tag = 'output window, operand 0']
    %10 = vsyncpa [#allocation3], 0
    %11 = vsyncpa [#allocation6], 0
    %s12 = scalar_lea.sflag [#allocation6], 1
    %13 = vsyncpa %s12, 0
    %14 = vsyncpa [#allocation9], 0
    %s15 = scalar_lea.sflag [#allocation9], 1
    %16 = vsyncpa %s15, 0
    %17 = vsyncpa [#allocation4], 0
    %s18 = scalar_lea.sflag [#allocation4], 1
    %19 = vsyncpa %s18, 0
    loop: start=0, step=1, limit=4
    $region2: #{tpu_custom_call.1} parent=1 // loop_pre_header
      _
    $region3: #{tpu_custom_call.1} parent=1 // loop_header
      %s21 = sphi 0, %s25
      %p22 = scmp.ge.s32.totalorder %s21, 4
      %s29 = sphi 0, %s29
      %s31 = sphi 0, %s29
      %s32 = sphi 0, %s31
      %s46 = sphi 0, %s32
      %s52 = sphi 0, %s54
      %s55 = sphi 0, %s52
      %s56 = sphi 0, %s55
      %s72 = sphi 0, %s56
      %s78 = sphi 0, %s80
      %s81 = sphi 0, %s78
      %s82 = sphi 0, %s81
      %s98 = sphi 0, %s82
      %s104 = sphi 0, %s106
      %s107 = sphi 0, %s104
      %s108 = sphi 0, %s107
      %s124 = sphi 0, %s108
      %s130 = sphi 0, %s132
      %s133 = sphi 0, %s130
      %s134 = sphi 0, %s133
      %s150 = sphi 0, %s134
      %s156 = sphi 0, %s158
      %s159 = sphi 0, %s156
      %s160 = sphi 0, %s159
      %s176 = sphi 0, %s160
    $region4: #{tpu_custom_call.1} parent=1 // loop_header_branch
      %24 = sbr.rel (%p22) target = $region8
    $region5: #{tpu_custom_call.1} parent=1 // loop_body
      %s26 = ssub.s32 %s21, 1
      %s27 = ssub.s32 %s21, 2
      %s28 = sadd.s32 %s21, 1
      %s30 = sadd.s32 %s29, 1
      %p33 = scmp.eq.s32.totalorder %s21, 1
      %p34 = scmp.ne.s32.totalorder %s29, %s31
      %p35 = scmp.eq.s32.totalorder %s21, 0
      %p36 = por %p34, %p35
      %p37 = scmp.ne.s32.totalorder %s29, %s31
      %p38 = scmp.eq.s32.totalorder %s26, 1
      %p39 = por %p37, %p38
      %p40 = scmp.ne.s32.totalorder %s31, %s32
      %p41 = scmp.eq.s32.totalorder %s26, 0
      %p42 = por %p40, %p41
      %p43 = scmp.ne.s32.totalorder %s31, %s32
      %p44 = scmp.eq.s32.totalorder %s27, 1
      %p45 = por %p43, %p44
      %p47 = scmp.ne.s32.totalorder %s32, %s46
      %p48 = scmp.eq.s32.totalorder %s27, 0
      %p49 = por %p47, %p48
      %s50 = ssub.s32 %s21, %s28
      %p51 = scmp.eq.s32.totalorder %s50, 0
      %s53 = sadd.s32 %s52, 1
      %s54 = scalar_select %p51, %s52, %s53
      %p57 = pneg %p51
      %p58 = scmp.eq.s32.totalorder %s21, 1
      %p59 = por %p57, %p58
      %p60 = scmp.ne.s32.totalorder %s52, %s55
      %p61 = scmp.eq.s32.totalorder %s21, 0
      %p62 = por %p60, %p61
      %p63 = scmp.ne.s32.totalorder %s52, %s55
      %p64 = scmp.eq.s32.totalorder %s26, 1
      %p65 = por %p63, %p64
      %p66 = scmp.ne.s32.totalorder %s55, %s56
      %p67 = scmp.eq.s32.totalorder %s26, 0
      %p68 = por %p66, %p67
      %p69 = scmp.ne.s32.totalorder %s55, %s56
      %p70 = scmp.eq.s32.totalorder %s27, 1
      %p71 = por %p69, %p70
      %p73 = scmp.ne.s32.totalorder %s56, %s72
      %p74 = scmp.eq.s32.totalorder %s27, 0
      %p75 = por %p73, %p74
      %s76 = ssub.s32 %s21, %s28
      %p77 = scmp.eq.s32.totalorder %s76, 0
      %s79 = sadd.s32 %s78, 1
      %s80 = scalar_select %p77, %s78, %s79
      %p83 = pneg %p77
      %p84 = scmp.eq.s32.totalorder %s21, 1
      %p85 = por %p83, %p84
      %p86 = scmp.ne.s32.totalorder %s78, %s81
      %p87 = scmp.eq.s32.totalorder %s21, 0
      %p88 = por %p86, %p87
      %p89 = scmp.ne.s32.totalorder %s78, %s81
      %p90 = scmp.eq.s32.totalorder %s26, 1
      %p91 = por %p89, %p90
      %p92 = scmp.ne.s32.totalorder %s81, %s82
      %p93 = scmp.eq.s32.totalorder %s26, 0
      %p94 = por %p92, %p93
      %p95 = scmp.ne.s32.totalorder %s81, %s82
      %p96 = scmp.eq.s32.totalorder %s27, 1
      %p97 = por %p95, %p96
      %p99 = scmp.ne.s32.totalorder %s82, %s98
      %p100 = scmp.eq.s32.totalorder %s27, 0
      %p101 = por %p99, %p100
      %s102 = ssub.s32 %s21, %s28
      %p103 = scmp.eq.s32.totalorder %s102, 0
      %s105 = sadd.s32 %s104, 1
      %s106 = scalar_select %p103, %s104, %s105
      %p109 = pneg %p103
      %p110 = scmp.eq.s32.totalorder %s21, 1
      %p111 = por %p109, %p110
      %p112 = scmp.ne.s32.totalorder %s104, %s107
      %p113 = scmp.eq.s32.totalorder %s21, 0
      %p114 = por %p112, %p113
      %p115 = scmp.ne.s32.totalorder %s104, %s107
      %p116 = scmp.eq.s32.totalorder %s26, 1
      %p117 = por %p115, %p116
      %p118 = scmp.ne.s32.totalorder %s107, %s108
      %p119 = scmp.eq.s32.totalorder %s26, 0
      %p120 = por %p118, %p119
      %p121 = scmp.ne.s32.totalorder %s107, %s108
      %p122 = scmp.eq.s32.totalorder %s27, 1
      %p123 = por %p121, %p122
      %p125 = scmp.ne.s32.totalorder %s108, %s124
      %p126 = scmp.eq.s32.totalorder %s27, 0
      %p127 = por %p125, %p126
      %s128 = ssub.s32 %s21, %s28
      %p129 = scmp.eq.s32.totalorder %s128, 0
      %s131 = sadd.s32 %s130, 1
      %s132 = scalar_select %p129, %s130, %s131
      %p135 = pneg %p129
      %p136 = scmp.eq.s32.totalorder %s21, 1
      %p137 = por %p135, %p136
      %p138 = scmp.ne.s32.totalorder %s130, %s133
      %p139 = scmp.eq.s32.totalorder %s21, 0
      %p140 = por %p138, %p139
      %p141 = scmp.ne.s32.totalorder %s130, %s133
      %p142 = scmp.eq.s32.totalorder %s26, 1
      %p143 = por %p141, %p142
      %p144 = scmp.ne.s32.totalorder %s133, %s134
      %p145 = scmp.eq.s32.totalorder %s26, 0
      %p146 = por %p144, %p145
      %p147 = scmp.ne.s32.totalorder %s133, %s134
      %p148 = scmp.eq.s32.totalorder %s27, 1
      %p149 = por %p147, %p148
      %p151 = scmp.ne.s32.totalorder %s134, %s150
      %p152 = scmp.eq.s32.totalorder %s27, 0
      %p153 = por %p151, %p152
      %s154 = ssub.s32 %s21, %s28
      %p155 = scmp.eq.s32.totalorder %s154, 0
      %s157 = sadd.s32 %s156, 1
      %s158 = scalar_select %p155, %s156, %s157
      %p161 = pneg %p155
      %p162 = scmp.eq.s32.totalorder %s21, 1
      %p163 = por %p161, %p162
      %p164 = scmp.ne.s32.totalorder %s156, %s159
      %p165 = scmp.eq.s32.totalorder %s21, 0
      %p166 = por %p164, %p165
      %p167 = scmp.ne.s32.totalorder %s156, %s159
      %p168 = scmp.eq.s32.totalorder %s26, 1
      %p169 = por %p167, %p168
      %p170 = scmp.ne.s32.totalorder %s159, %s160
      %p171 = scmp.eq.s32.totalorder %s26, 0
      %p172 = por %p170, %p171
      %p173 = scmp.ne.s32.totalorder %s159, %s160
      %p174 = scmp.eq.s32.totalorder %s27, 1
      %p175 = por %p173, %p174
      %p177 = scmp.ne.s32.totalorder %s160, %s176
      %p178 = scmp.eq.s32.totalorder %s27, 0
      %p179 = por %p177, %p178
      %p180 = scmp.le.s32.totalorder 1, %s21
      %p181 = scmp.lt.s32.totalorder %s21, 3
      %p182 = pnand %p180, %p181
      %p183 = pneg %p182
      // Predicated region
      $region9: #{tpu_custom_call.1} parent=5 // pred_check
        _
      $region10: #{tpu_custom_call.1} parent=5 // pred_check_branch
        %185 = sbr.rel (%p182) target = $region12
      $region11: #{tpu_custom_call.1} parent=5 // pred_region
        %s186 = ssub.s32 %s21, 1
        // Predicated region
        $region13: #{tpu_custom_call.1} parent=11 // pred_check
          %p187 = pneg %p42
        $region14: #{tpu_custom_call.1} parent=11 // pred_check_branch
          %189 = sbr.rel (%p187) target = $region16
        $region15: #{tpu_custom_call.1} parent=11 // pred_region
          %191 = vsyncadd [#allocation3], 0
          %s192 = sshll.u32 %s0, 4
          %s193 = int_to_ptr.hbm [resolvable:$true] %s192
          %s194 = sshll.u32 [#allocation2], 4
          %s195 = int_to_ptr.vmem [resolvable:$true] %s194
          %200 = dma.hbm_to_vmem [thread:$0]  %s193, 1920, %s195, [#allocation3], 960, 960, 60
        $region16: #{tpu_custom_call.1} parent=11 // pred_fallthru
          _
      $region12: #{tpu_custom_call.1} parent=5 // pred_fallthru
        _
      %p201 = scmp.lt.s32.totalorder %s21, 2
      // Predicated region
      $region17: #{tpu_custom_call.1} parent=5 // pred_check
        %p202 = pneg %p201
      $region18: #{tpu_custom_call.1} parent=5 // pred_check_branch
        %204 = sbr.rel (%p202) target = $region20
      $region19: #{tpu_custom_call.1} parent=5 // pred_region
        // Predicated region
        $region21: #{tpu_custom_call.1} parent=19 // pred_check
          %p205 = pneg %p62
        $region22: #{tpu_custom_call.1} parent=19 // pred_check_branch
          %207 = sbr.rel (%p205) target = $region24
        $region23: #{tpu_custom_call.1} parent=19 // pred_region
          %s208 = sand.u32 %s21, 1
          %s209 = scalar_lea.sflag [#allocation6], %s208
          %s210 = sand.u32 %s52, 1
          %s211 = smul.addr %s210, 1920
          %s212 = scalar_lea.vmem [#allocation5], %s211
          %214 = vsyncadd %s209, 0
          %s215 = smul.addr %s21, 480
          %s216 = smul.addr %s215, 4
          %s217 = scalar_lea.hbm %s1, %s216
          %s218 = sshll.u32 %s217, 4
          %s219 = int_to_ptr.hbm [resolvable:$true] %s218
          %s220 = sshll.u32 %s212, 4
          %s221 = int_to_ptr.vmem [resolvable:$true] %s220
          %226 = dma.hbm_to_vmem [thread:$0]  %s219, 30720, %s221, %s209, 128, 128, 8
        $region24: #{tpu_custom_call.1} parent=19 // pred_fallthru
          _
        // Predicated region
        $region25: #{tpu_custom_call.1} parent=19 // pred_check
          %p227 = pneg %p88
        $region26: #{tpu_custom_call.1} parent=19 // pred_check_branch
          %229 = sbr.rel (%p227) target = $region28
        $region27: #{tpu_custom_call.1} parent=19 // pred_region
          %s230 = sand.u32 %s21, 1
          %s231 = scalar_lea.sflag [#allocation6], %s230
          %s232 = sand.u32 %s78, 1
          %s233 = smul.addr %s232, 2
          %s234 = scalar_lea.vmem [#allocation7], %s233
          %s235 = smul.u32 2, %s21
          %237 = vsyncadd %s231, 0
          %s238 = scalar_lea.hbm %s2, %s235
          %s240 = sshll.u32 %s238, 4
          %s241 = int_to_ptr.hbm [resolvable:$true] %s240
          %s242 = sshll.u32 %s234, 4
          %s243 = int_to_ptr.vmem [resolvable:$true] %s242
          %245 = dma.hbm_to_vmem [thread:$0]  %s241, 32, %s243, %s231
        $region28: #{tpu_custom_call.1} parent=19 // pred_fallthru
          _
        // Predicated region
        $region29: #{tpu_custom_call.1} parent=19 // pred_check
          %p246 = pneg %p114
        $region30: #{tpu_custom_call.1} parent=19 // pred_check_branch
          %248 = sbr.rel (%p246) target = $region32
        $region31: #{tpu_custom_call.1} parent=19 // pred_region
          %s249 = sand.u32 %s21, 1
          %s250 = scalar_lea.sflag [#allocation9], %s249
          %s251 = sand.u32 %s104, 1
          %s252 = smul.addr %s251, 128
          %s253 = scalar_lea.vmem [#allocation8], %s252
          %s254 = smul.u32 2, %s21
          %256 = vsyncadd %s250, 0
          %s257 = smul.addr %s254, 16
          %s258 = smul.addr %s257, 4
          %s259 = scalar_lea.hbm %s3, %s258
          %s260 = sshll.u32 %s259, 4
          %s261 = int_to_ptr.hbm [resolvable:$true] %s260
          %s262 = sshll.u32 %s253, 4
          %s263 = int_to_ptr.vmem [resolvable:$true] %s262
          %268 = dma.hbm_to_vmem [thread:$0]  %s261, 2048, %s263, %s250, 64, 64, 4
        $region32: #{tpu_custom_call.1} parent=19 // pred_fallthru
          _
        // Predicated region
        $region33: #{tpu_custom_call.1} parent=19 // pred_check
          %p269 = pneg %p140
        $region34: #{tpu_custom_call.1} parent=19 // pred_check_branch
          %271 = sbr.rel (%p269) target = $region36
        $region35: #{tpu_custom_call.1} parent=19 // pred_region
          %s272 = sand.u32 %s21, 1
          %s273 = scalar_lea.sflag [#allocation9], %s272
          %s274 = sand.u32 %s130, 1
          %s275 = smul.addr %s274, 2
          %s276 = scalar_lea.vmem [#allocation10], %s275
          %s277 = smul.u32 2, %s21
          %279 = vsyncadd %s273, 0
          %s280 = scalar_lea.hbm %s4, %s277
          %s281 = sshll.u32 %s280, 4
          %s282 = int_to_ptr.hbm [resolvable:$true] %s281
          %s283 = sshll.u32 %s276, 4
          %s284 = int_to_ptr.vmem [resolvable:$true] %s283
          %289 = dma.hbm_to_vmem [thread:$0]  %s282, 32, %s284, %s273, 16, 16, 1
        $region36: #{tpu_custom_call.1} parent=19 // pred_fallthru
          _
      $region20: #{tpu_custom_call.1} parent=5 // pred_fallthru
        _
      %p290 = scmp.le.s32.totalorder 1, %s21
      %p291 = scmp.lt.s32.totalorder %s21, 3
      %p292 = pnand %p290, %p291
      %p293 = pneg %p292
      // Predicated region
      $region37: #{tpu_custom_call.1} parent=5 // pred_check
        _
      $region38: #{tpu_custom_call.1} parent=5 // pred_check_branch
        %295 = sbr.rel (%p292) target = $region40
      $region39: #{tpu_custom_call.1} parent=5 // pred_region
        %s296 = ssub.s32 %s21, 1
        // Predicated region
        $region41: #{tpu_custom_call.1} parent=39 // pred_check
          %p297 = pneg %p42
        $region42: #{tpu_custom_call.1} parent=39 // pred_check_branch
          %299 = sbr.rel (%p297) target = $region44
        $region43: #{tpu_custom_call.1} parent=39 // pred_region
          %301 = dma.done [#allocation3], 1920
        $region44: #{tpu_custom_call.1} parent=39 // pred_fallthru
          _
        %s302 = sand.u32 %s26, 1
        %s303 = scalar_lea.sflag [#allocation6], %s302
        %s304 = sand.u32 %s55, 1
        %s305 = smul.addr %s304, 1920
        %s306 = scalar_lea.vmem [#allocation5], %s305
        // Predicated region
        $region45: #{tpu_custom_call.1} parent=39 // pred_check
          %p307 = pneg %p68
        $region46: #{tpu_custom_call.1} parent=39 // pred_check_branch
          %309 = sbr.rel (%p307) target = $region48
        $region47: #{tpu_custom_call.1} parent=39 // pred_region
          %311 = dma.done %s303, 30720
        $region48: #{tpu_custom_call.1} parent=39 // pred_fallthru
          _
        %s312 = sand.u32 %s26, 1
        %s313 = scalar_lea.sflag [#allocation6], %s312
        %s314 = sand.u32 %s81, 1
        %s315 = smul.addr %s314, 2
        %s316 = scalar_lea.vmem [#allocation7], %s315
        // Predicated region
        $region49: #{tpu_custom_call.1} parent=39 // pred_check
          %p317 = pneg %p94
        $region50: #{tpu_custom_call.1} parent=39 // pred_check_branch
          %319 = sbr.rel (%p317) target = $region52
        $region51: #{tpu_custom_call.1} parent=39 // pred_region
          %321 = dma.done %s313, 32
        $region52: #{tpu_custom_call.1} parent=39 // pred_fallthru
          _
        %s322 = sand.u32 %s26, 1
        %s323 = scalar_lea.sflag [#allocation9], %s322
        %s324 = sand.u32 %s107, 1
        %s325 = smul.addr %s324, 128
        %s326 = scalar_lea.vmem [#allocation8], %s325
        // Predicated region
        $region53: #{tpu_custom_call.1} parent=39 // pred_check
          %p327 = pneg %p120
        $region54: #{tpu_custom_call.1} parent=39 // pred_check_branch
          %329 = sbr.rel (%p327) target = $region56
        $region55: #{tpu_custom_call.1} parent=39 // pred_region
          %331 = dma.done %s323, 2048
        $region56: #{tpu_custom_call.1} parent=39 // pred_fallthru
          _
        %s332 = sand.u32 %s26, 1
        %s333 = scalar_lea.sflag [#allocation9], %s332
        %s334 = sand.u32 %s133, 1
        %s335 = smul.addr %s334, 2
        %s336 = scalar_lea.vmem [#allocation10], %s335
        // Predicated region
        $region57: #{tpu_custom_call.1} parent=39 // pred_check
          %p337 = pneg %p146
        $region58: #{tpu_custom_call.1} parent=39 // pred_check_branch
          %339 = sbr.rel (%p337) target = $region60
        $region59: #{tpu_custom_call.1} parent=39 // pred_region
          %341 = dma.done %s333, 32
        $region60: #{tpu_custom_call.1} parent=39 // pred_fallthru
          _
        %p342 = pneg %p42
        %p343 = pneg %p39
        %s344 = sand.u32 %s26, 1
        %s345 = scalar_lea.sflag [#allocation6], %s344
        %s346 = sand.u32 %s55, 1
        %s347 = smul.addr %s346, 1920
        %s348 = scalar_lea.vmem [#allocation5], %s347
        %p349 = pneg %p68
        %p350 = pneg %p65
        %s351 = sand.u32 %s26, 1
        %s352 = scalar_lea.sflag [#allocation6], %s351
        %s353 = sand.u32 %s81, 1
        %s354 = smul.addr %s353, 2
        %s355 = scalar_lea.vmem [#allocation7], %s354
        %p356 = pneg %p94
        %p357 = pneg %p91
        %s358 = sand.u32 %s26, 1
        %s359 = scalar_lea.sflag [#allocation9], %s358
        %s360 = sand.u32 %s107, 1
        %s361 = smul.addr %s360, 128
        %s362 = scalar_lea.vmem [#allocation8], %s361
        %p363 = pneg %p120
        %p364 = pneg %p117
        %s365 = sand.u32 %s26, 1
        %s366 = scalar_lea.sflag [#allocation9], %s365
        %s367 = sand.u32 %s133, 1
        %s368 = smul.addr %s367, 2
        %s369 = scalar_lea.vmem [#allocation10], %s368
        %p370 = pneg %p146
        %p371 = pneg %p143
        %p372 = pneg %p172
        %p373 = pneg %p169
        %s374 = sand.u32 %s159, 1
        %s375 = scalar_lea.sflag [#allocation4], %s374
        %s376 = sand.u32 %s159, 1
        %s377 = smul.addr %s376, 32
        %s378 = scalar_lea.vmem [#allocation11], %s377
        %s379 = smul.u32 2, %s26
        %s380 = smul.u32 2, %s26
        %s381 = smul.u32 2, %s26
        %s382 = smul.u32 2, %s26
        %v383 = vld [vmem:[%s306] sm:$0xff]
        %v384 = vld [vmem:[%s306 + $0x8] sm:$0xff]
        %v385 = vld [vmem:[%s306 + $0x10] sm:$0xff]
        %v386 = vld [vmem:[%s306 + $0x18] sm:$0xff]
        %v387 = vld [vmem:[%s306 + $0x20] sm:$0xff]
        %v388 = vld [vmem:[%s306 + $0x28] sm:$0xff]
        %v389 = vld [vmem:[%s306 + $0x30] sm:$0xff]
        %v390 = vld [vmem:[%s306 + $0x38] sm:$0xff]
        %v391 = vld [vmem:[%s306 + $0x40] sm:$0xff]
        %v392 = vld [vmem:[%s306 + $0x48] sm:$0xff]
        %v393 = vld [vmem:[%s306 + $0x50] sm:$0xff]
        %v394 = vld [vmem:[%s306 + $0x58] sm:$0xff]
        %v395 = vld [vmem:[%s306 + $0x60] sm:$0xff]
        %v396 = vld [vmem:[%s306 + $0x68] sm:$0xff]
        %v397 = vld [vmem:[%s306 + $0x70] sm:$0xff]
        %v398 = vld [vmem:[%s306 + $0x78] sm:$0xff]
        %v399 = vld [vmem:[%s306 + $0x80] sm:$0xff]
        %v400 = vld [vmem:[%s306 + $0x88] sm:$0xff]
        %v401 = vld [vmem:[%s306 + $0x90] sm:$0xff]
        %v402 = vld [vmem:[%s306 + $0x98] sm:$0xff]
        %v403 = vld [vmem:[%s306 + $0xa0] sm:$0xff]
        %v404 = vld [vmem:[%s306 + $0xa8] sm:$0xff]
        %v405 = vld [vmem:[%s306 + $0xb0] sm:$0xff]
        %v406 = vld [vmem:[%s306 + $0xb8] sm:$0xff]
        %v407 = vld [vmem:[%s306 + $0xc0] sm:$0xff]
        %v408 = vld [vmem:[%s306 + $0xc8] sm:$0xff]
        %v409 = vld [vmem:[%s306 + $0xd0] sm:$0xff]
        %v410 = vld [vmem:[%s306 + $0xd8] sm:$0xff]
        %v411 = vld [vmem:[%s306 + $0xe0] sm:$0xff]
        %v412 = vld [vmem:[%s306 + $0xe8] sm:$0xff]
        %v413 = vld [vmem:[%s306 + $0xf0] sm:$0xff]
        %v414 = vld [vmem:[%s306 + $0xf8] sm:$0xff]
        %v415 = vld [vmem:[%s306 + $0x100] sm:$0xff]
        %v416 = vld [vmem:[%s306 + $0x108] sm:$0xff]
        %v417 = vld [vmem:[%s306 + $0x110] sm:$0xff]
        %v418 = vld [vmem:[%s306 + $0x118] sm:$0xff]
        %v419 = vld [vmem:[%s306 + $0x120] sm:$0xff]
        %v420 = vld [vmem:[%s306 + $0x128] sm:$0xff]
        %v421 = vld [vmem:[%s306 + $0x130] sm:$0xff]
        %v422 = vld [vmem:[%s306 + $0x138] sm:$0xff]
        %v423 = vld [vmem:[%s306 + $0x140] sm:$0xff]
        %v424 = vld [vmem:[%s306 + $0x148] sm:$0xff]
        %v425 = vld [vmem:[%s306 + $0x150] sm:$0xff]
        %v426 = vld [vmem:[%s306 + $0x158] sm:$0xff]
        %v427 = vld [vmem:[%s306 + $0x160] sm:$0xff]
        %v428 = vld [vmem:[%s306 + $0x168] sm:$0xff]
        %v429 = vld [vmem:[%s306 + $0x170] sm:$0xff]
        %v430 = vld [vmem:[%s306 + $0x178] sm:$0xff]
        %v431 = vld [vmem:[%s306 + $0x180] sm:$0xff]
        %v432 = vld [vmem:[%s306 + $0x188] sm:$0xff]
        %v433 = vld [vmem:[%s306 + $0x190] sm:$0xff]
        %v434 = vld [vmem:[%s306 + $0x198] sm:$0xff]
        %v435 = vld [vmem:[%s306 + $0x1a0] sm:$0xff]
        %v436 = vld [vmem:[%s306 + $0x1a8] sm:$0xff]
        %v437 = vld [vmem:[%s306 + $0x1b0] sm:$0xff]
        %v438 = vld [vmem:[%s306 + $0x1b8] sm:$0xff]
        %v439 = vld [vmem:[%s306 + $0x1c0] sm:$0xff]
        %v440 = vld [vmem:[%s306 + $0x1c8] sm:$0xff]
        %v441 = vld [vmem:[%s306 + $0x1d0] sm:$0xff]
        %v442 = vld [vmem:[%s306 + $0x1d8] sm:$0xff]
        %v443 = vld [vmem:[%s306 + $0x1e0] sm:$0xff]
        %v444 = vld [vmem:[%s306 + $0x1e8] sm:$0xff]
        %v445 = vld [vmem:[%s306 + $0x1f0] sm:$0xff]
        %v446 = vld [vmem:[%s306 + $0x1f8] sm:$0xff]
        %v447 = vld [vmem:[%s306 + $0x200] sm:$0xff]
        %v448 = vld [vmem:[%s306 + $0x208] sm:$0xff]
        %v449 = vld [vmem:[%s306 + $0x210] sm:$0xff]
        %v450 = vld [vmem:[%s306 + $0x218] sm:$0xff]
        %v451 = vld [vmem:[%s306 + $0x220] sm:$0xff]
        %v452 = vld [vmem:[%s306 + $0x228] sm:$0xff]
        %v453 = vld [vmem:[%s306 + $0x230] sm:$0xff]
        %v454 = vld [vmem:[%s306 + $0x238] sm:$0xff]
        %v455 = vld [vmem:[%s306 + $0x240] sm:$0xff]
        %v456 = vld [vmem:[%s306 + $0x248] sm:$0xff]
        %v457 = vld [vmem:[%s306 + $0x250] sm:$0xff]
        %v458 = vld [vmem:[%s306 + $0x258] sm:$0xff]
        %v459 = vld [vmem:[%s306 + $0x260] sm:$0xff]
        %v460 = vld [vmem:[%s306 + $0x268] sm:$0xff]
        %v461 = vld [vmem:[%s306 + $0x270] sm:$0xff]
        %v462 = vld [vmem:[%s306 + $0x278] sm:$0xff]
        %v463 = vld [vmem:[%s306 + $0x280] sm:$0xff]
        %v464 = vld [vmem:[%s306 + $0x288] sm:$0xff]
        %v465 = vld [vmem:[%s306 + $0x290] sm:$0xff]
        %v466 = vld [vmem:[%s306 + $0x298] sm:$0xff]
        %v467 = vld [vmem:[%s306 + $0x2a0] sm:$0xff]
        %v468 = vld [vmem:[%s306 + $0x2a8] sm:$0xff]
        %v469 = vld [vmem:[%s306 + $0x2b0] sm:$0xff]
        %v470 = vld [vmem:[%s306 + $0x2b8] sm:$0xff]
        %v471 = vld [vmem:[%s306 + $0x2c0] sm:$0xff]
        %v472 = vld [vmem:[%s306 + $0x2c8] sm:$0xff]
        %v473 = vld [vmem:[%s306 + $0x2d0] sm:$0xff]
        %v474 = vld [vmem:[%s306 + $0x2d8] sm:$0xff]
        %v475 = vld [vmem:[%s306 + $0x2e0] sm:$0xff]
        %v476 = vld [vmem:[%s306 + $0x2e8] sm:$0xff]
        %v477 = vld [vmem:[%s306 + $0x2f0] sm:$0xff]
        %v478 = vld [vmem:[%s306 + $0x2f8] sm:$0xff]
        %v479 = vld [vmem:[%s306 + $0x300] sm:$0xff]
        %v480 = vld [vmem:[%s306 + $0x308] sm:$0xff]
        %v481 = vld [vmem:[%s306 + $0x310] sm:$0xff]
        %v482 = vld [vmem:[%s306 + $0x318] sm:$0xff]
        %v483 = vld [vmem:[%s306 + $0x320] sm:$0xff]
        %v484 = vld [vmem:[%s306 + $0x328] sm:$0xff]
        %v485 = vld [vmem:[%s306 + $0x330] sm:$0xff]
        %v486 = vld [vmem:[%s306 + $0x338] sm:$0xff]
        %v487 = vld [vmem:[%s306 + $0x340] sm:$0xff]
        %v488 = vld [vmem:[%s306 + $0x348] sm:$0xff]
        %v489 = vld [vmem:[%s306 + $0x350] sm:$0xff]
        %v490 = vld [vmem:[%s306 + $0x358] sm:$0xff]
        %v491 = vld [vmem:[%s306 + $0x360] sm:$0xff]
        %v492 = vld [vmem:[%s306 + $0x368] sm:$0xff]
        %v493 = vld [vmem:[%s306 + $0x370] sm:$0xff]
        %v494 = vld [vmem:[%s306 + $0x378] sm:$0xff]
        %v495 = vld [vmem:[%s306 + $0x380] sm:$0xff]
        %v496 = vld [vmem:[%s306 + $0x388] sm:$0xff]
        %v497 = vld [vmem:[%s306 + $0x390] sm:$0xff]
        %v498 = vld [vmem:[%s306 + $0x398] sm:$0xff]
        %v499 = vld [vmem:[%s306 + $0x3a0] sm:$0xff]
        %v500 = vld [vmem:[%s306 + $0x3a8] sm:$0xff]
        %v501 = vld [vmem:[%s306 + $0x3b0] sm:$0xff]
        %v502 = vld [vmem:[%s306 + $0x3b8] sm:$0xff]
        %v503 = vld [vmem:[%s306 + $0x3c0] sm:$0xff]
        %v504 = vld [vmem:[%s306 + $0x3c8] sm:$0xff]
        %v505 = vld [vmem:[%s306 + $0x3d0] sm:$0xff]
        %v506 = vld [vmem:[%s306 + $0x3d8] sm:$0xff]
        %v507 = vld [vmem:[%s306 + $0x3e0] sm:$0xff]
        %v508 = vld [vmem:[%s306 + $0x3e8] sm:$0xff]
        %v509 = vld [vmem:[%s306 + $0x3f0] sm:$0xff]
        %v510 = vld [vmem:[%s306 + $0x3f8] sm:$0xff]
        %v511 = vld [vmem:[%s306 + $0x400] sm:$0xff]
        %v512 = vld [vmem:[%s306 + $0x408] sm:$0xff]
        %v513 = vld [vmem:[%s306 + $0x410] sm:$0xff]
        %v514 = vld [vmem:[%s306 + $0x418] sm:$0xff]
        %v515 = vld [vmem:[%s306 + $0x420] sm:$0xff]
        %v516 = vld [vmem:[%s306 + $0x428] sm:$0xff]
        %v517 = vld [vmem:[%s306 + $0x430] sm:$0xff]
        %v518 = vld [vmem:[%s306 + $0x438] sm:$0xff]
        %v519 = vld [vmem:[%s306 + $0x440] sm:$0xff]
        %v520 = vld [vmem:[%s306 + $0x448] sm:$0xff]
        %v521 = vld [vmem:[%s306 + $0x450] sm:$0xff]
        %v522 = vld [vmem:[%s306 + $0x458] sm:$0xff]
        %v523 = vld [vmem:[%s306 + $0x460] sm:$0xff]
        %v524 = vld [vmem:[%s306 + $0x468] sm:$0xff]
        %v525 = vld [vmem:[%s306 + $0x470] sm:$0xff]
        %v526 = vld [vmem:[%s306 + $0x478] sm:$0xff]
        %v527 = vld [vmem:[%s306 + $0x480] sm:$0xff]
        %v528 = vld [vmem:[%s306 + $0x488] sm:$0xff]
        %v529 = vld [vmem:[%s306 + $0x490] sm:$0xff]
        %v530 = vld [vmem:[%s306 + $0x498] sm:$0xff]
        %v531 = vld [vmem:[%s306 + $0x4a0] sm:$0xff]
        %v532 = vld [vmem:[%s306 + $0x4a8] sm:$0xff]
        %v533 = vld [vmem:[%s306 + $0x4b0] sm:$0xff]
        %v534 = vld [vmem:[%s306 + $0x4b8] sm:$0xff]
        %v535 = vld [vmem:[%s306 + $0x4c0] sm:$0xff]
        %v536 = vld [vmem:[%s306 + $0x4c8] sm:$0xff]
        %v537 = vld [vmem:[%s306 + $0x4d0] sm:$0xff]
        %v538 = vld [vmem:[%s306 + $0x4d8] sm:$0xff]
        %v539 = vld [vmem:[%s306 + $0x4e0] sm:$0xff]
        %v540 = vld [vmem:[%s306 + $0x4e8] sm:$0xff]
        %v541 = vld [vmem:[%s306 + $0x4f0] sm:$0xff]
        %v542 = vld [vmem:[%s306 + $0x4f8] sm:$0xff]
        %v543 = vld [vmem:[%s306 + $0x500] sm:$0xff]
        %v544 = vld [vmem:[%s306 + $0x508] sm:$0xff]
        %v545 = vld [vmem:[%s306 + $0x510] sm:$0xff]
        %v546 = vld [vmem:[%s306 + $0x518] sm:$0xff]
        %v547 = vld [vmem:[%s306 + $0x520] sm:$0xff]
        %v548 = vld [vmem:[%s306 + $0x528] sm:$0xff]
        %v549 = vld [vmem:[%s306 + $0x530] sm:$0xff]
        %v550 = vld [vmem:[%s306 + $0x538] sm:$0xff]
        %v551 = vld [vmem:[%s306 + $0x540] sm:$0xff]
        %v552 = vld [vmem:[%s306 + $0x548] sm:$0xff]
        %v553 = vld [vmem:[%s306 + $0x550] sm:$0xff]
        %v554 = vld [vmem:[%s306 + $0x558] sm:$0xff]
        %v555 = vld [vmem:[%s306 + $0x560] sm:$0xff]
        %v556 = vld [vmem:[%s306 + $0x568] sm:$0xff]
        %v557 = vld [vmem:[%s306 + $0x570] sm:$0xff]
        %v558 = vld [vmem:[%s306 + $0x578] sm:$0xff]
        %v559 = vld [vmem:[%s306 + $0x580] sm:$0xff]
        %v560 = vld [vmem:[%s306 + $0x588] sm:$0xff]
        %v561 = vld [vmem:[%s306 + $0x590] sm:$0xff]
        %v562 = vld [vmem:[%s306 + $0x598] sm:$0xff]
        %v563 = vld [vmem:[%s306 + $0x5a0] sm:$0xff]
        %v564 = vld [vmem:[%s306 + $0x5a8] sm:$0xff]
        %v565 = vld [vmem:[%s306 + $0x5b0] sm:$0xff]
        %v566 = vld [vmem:[%s306 + $0x5b8] sm:$0xff]
        %v567 = vld [vmem:[%s306 + $0x5c0] sm:$0xff]
        %v568 = vld [vmem:[%s306 + $0x5c8] sm:$0xff]
        %v569 = vld [vmem:[%s306 + $0x5d0] sm:$0xff]
        %v570 = vld [vmem:[%s306 + $0x5d8] sm:$0xff]
        %v571 = vld [vmem:[%s306 + $0x5e0] sm:$0xff]
        %v572 = vld [vmem:[%s306 + $0x5e8] sm:$0xff]
        %v573 = vld [vmem:[%s306 + $0x5f0] sm:$0xff]
        %v574 = vld [vmem:[%s306 + $0x5f8] sm:$0xff]
        %v575 = vld [vmem:[%s306 + $0x600] sm:$0xff]
        %v576 = vld [vmem:[%s306 + $0x608] sm:$0xff]
        %v577 = vld [vmem:[%s306 + $0x610] sm:$0xff]
        %v578 = vld [vmem:[%s306 + $0x618] sm:$0xff]
        %v579 = vld [vmem:[%s306 + $0x620] sm:$0xff]
        %v580 = vld [vmem:[%s306 + $0x628] sm:$0xff]
        %v581 = vld [vmem:[%s306 + $0x630] sm:$0xff]
        %v582 = vld [vmem:[%s306 + $0x638] sm:$0xff]
        %v583 = vld [vmem:[%s306 + $0x640] sm:$0xff]
        %v584 = vld [vmem:[%s306 + $0x648] sm:$0xff]
        %v585 = vld [vmem:[%s306 + $0x650] sm:$0xff]
        %v586 = vld [vmem:[%s306 + $0x658] sm:$0xff]
        %v587 = vld [vmem:[%s306 + $0x660] sm:$0xff]
        %v588 = vld [vmem:[%s306 + $0x668] sm:$0xff]
        %v589 = vld [vmem:[%s306 + $0x670] sm:$0xff]
        %v590 = vld [vmem:[%s306 + $0x678] sm:$0xff]
        %v591 = vld [vmem:[%s306 + $0x680] sm:$0xff]
        %v592 = vld [vmem:[%s306 + $0x688] sm:$0xff]
        %v593 = vld [vmem:[%s306 + $0x690] sm:$0xff]
        %v594 = vld [vmem:[%s306 + $0x698] sm:$0xff]
        %v595 = vld [vmem:[%s306 + $0x6a0] sm:$0xff]
        %v596 = vld [vmem:[%s306 + $0x6a8] sm:$0xff]
        %v597 = vld [vmem:[%s306 + $0x6b0] sm:$0xff]
        %v598 = vld [vmem:[%s306 + $0x6b8] sm:$0xff]
        %v599 = vld [vmem:[%s306 + $0x6c0] sm:$0xff]
        %v600 = vld [vmem:[%s306 + $0x6c8] sm:$0xff]
        %v601 = vld [vmem:[%s306 + $0x6d0] sm:$0xff]
        %v602 = vld [vmem:[%s306 + $0x6d8] sm:$0xff]
        %v603 = vld [vmem:[%s306 + $0x6e0] sm:$0xff]
        %v604 = vld [vmem:[%s306 + $0x6e8] sm:$0xff]
        %v605 = vld [vmem:[%s306 + $0x6f0] sm:$0xff]
        %v606 = vld [vmem:[%s306 + $0x6f8] sm:$0xff]
        %v607 = vld [vmem:[%s306 + $0x700] sm:$0xff]
        %v608 = vld [vmem:[%s306 + $0x708] sm:$0xff]
        %v609 = vld [vmem:[%s306 + $0x710] sm:$0xff]
        %v610 = vld [vmem:[%s306 + $0x718] sm:$0xff]
        %v611 = vld [vmem:[%s306 + $0x720] sm:$0xff]
        %v612 = vld [vmem:[%s306 + $0x728] sm:$0xff]
        %v613 = vld [vmem:[%s306 + $0x730] sm:$0xff]
        %v614 = vld [vmem:[%s306 + $0x738] sm:$0xff]
        %v615 = vld [vmem:[%s306 + $0x740] sm:$0xff]
        %v616 = vld [vmem:[%s306 + $0x748] sm:$0xff]
        %v617 = vld [vmem:[%s306 + $0x750] sm:$0xff]
        %v618 = vld [vmem:[%s306 + $0x758] sm:$0xff]
        %v619 = vld [vmem:[%s306 + $0x760] sm:$0xff]
        %v620 = vld [vmem:[%s306 + $0x768] sm:$0xff]
        %v621 = vld [vmem:[%s306 + $0x770] sm:$0xff]
        %v622 = vld [vmem:[%s306 + $0x778] sm:$0xff]
        %v623 = vld [vmem:[#allocation2] sm:$0xff]
        %v624 = vld [vmem:[#allocation2 + $0x8] sm:$0xff]
        %v625 = vld [vmem:[#allocation2 + $0x10] sm:$0xff]
        %v626 = vld [vmem:[#allocation2 + $0x18] sm:$0xff]
        %v627 = vld [vmem:[#allocation2 + $0x20] sm:$0xff]
        %v628 = vld [vmem:[#allocation2 + $0x28] sm:$0xff]
        %v629 = vld [vmem:[#allocation2 + $0x30] sm:$0xff]
        %v630 = vld [vmem:[#allocation2 + $0x38] sm:$0xf]
        %v631 = vld [vmem:[#allocation2 + $0x3c] sm:$0xff]
        %v632 = vld [vmem:[#allocation2 + $0x44] sm:$0xff]
        %v633 = vld [vmem:[#allocation2 + $0x4c] sm:$0xff]
        %v634 = vld [vmem:[#allocation2 + $0x54] sm:$0xff]
        %v635 = vld [vmem:[#allocation2 + $0x5c] sm:$0xff]
        %v636 = vld [vmem:[#allocation2 + $0x64] sm:$0xff]
        %v637 = vld [vmem:[#allocation2 + $0x6c] sm:$0xff]
        %v638 = vld [vmem:[#allocation2 + $0x74] sm:$0xf]
        %v639 = vld [vmem:[%s316] sm:$0x3]
        %v641 = vperm.slane %v639, 0
        %v642 = vperm.slane %v639, 1
        %v661 = vunpack.c.l.b16 %v623
        %v662 = vunpack.c.h.b16 %v623
        %v663 = vunpack.c.l.b16 %v624
        %v664 = vunpack.c.h.b16 %v624
        %v665 = vunpack.c.l.b16 %v625
        %v666 = vunpack.c.h.b16 %v625
        %v667 = vunpack.c.l.b16 %v626
        %v668 = vunpack.c.h.b16 %v626
        %v669 = vunpack.c.l.b16 %v627
        %v670 = vunpack.c.h.b16 %v627
        %v671 = vunpack.c.l.b16 %v628
        %v672 = vunpack.c.h.b16 %v628
        %v673 = vunpack.c.l.b16 %v629
        %v674 = vunpack.c.h.b16 %v629
        %v675 = vunpack.c.l.b16 %v630
        %v676 = vunpack.c.l.b16 %v631
        %v677 = vunpack.c.h.b16 %v631
        %v678 = vunpack.c.l.b16 %v632
        %v679 = vunpack.c.h.b16 %v632
        %v680 = vunpack.c.l.b16 %v633
        %v681 = vunpack.c.h.b16 %v633
        %v682 = vunpack.c.l.b16 %v634
        %v683 = vunpack.c.h.b16 %v634
        %v684 = vunpack.c.l.b16 %v635
        %v685 = vunpack.c.h.b16 %v635
        %v686 = vunpack.c.l.b16 %v636
        %v687 = vunpack.c.h.b16 %v636
        %v688 = vunpack.c.l.b16 %v637
        %v689 = vunpack.c.h.b16 %v637
        %v690 = vunpack.c.l.b16 %v638
        %v691 = vpack.c.b16 %v676, %v661
        %v692 = vpack.c.b16 %v677, %v662
        %v693 = vpack.c.b16 %v678, %v663
        %v694 = vpack.c.b16 %v679, %v664
        %v695 = vpack.c.b16 %v680, %v665
        %v696 = vpack.c.b16 %v681, %v666
        %v697 = vpack.c.b16 %v682, %v667
        %v698 = vpack.c.b16 %v683, %v668
        %v699 = vpack.c.b16 %v684, %v669
        %v700 = vpack.c.b16 %v685, %v670
        %v701 = vpack.c.b16 %v686, %v671
        %v702 = vpack.c.b16 %v687, %v672
        %v703 = vpack.c.b16 %v688, %v673
        %v704 = vpack.c.b16 %v689, %v674
        %v705 = vpack.c.b16 %v690, %v675
        %v961 = vunpack.c.l.b16 %v383
        %v962 = vunpack.c.h.b16 %v383
        %v963 = vunpack.c.l.b16 %v384
        %v964 = vunpack.c.h.b16 %v384
        %v965 = vunpack.c.l.b16 %v385
        %v966 = vunpack.c.h.b16 %v385
        %v967 = vunpack.c.l.b16 %v386
        %v968 = vunpack.c.h.b16 %v386
        %v969 = vunpack.c.l.b16 %v387
        %v970 = vunpack.c.h.b16 %v387
        %v971 = vunpack.c.l.b16 %v388
        %v972 = vunpack.c.h.b16 %v388
        %v973 = vunpack.c.l.b16 %v389
        %v974 = vunpack.c.h.b16 %v389
        %v975 = vunpack.c.l.b16 %v390
        %v976 = vunpack.c.h.b16 %v390
        %v977 = vunpack.c.l.b16 %v391
        %v978 = vunpack.c.h.b16 %v391
        %v979 = vunpack.c.l.b16 %v392
        %v980 = vunpack.c.h.b16 %v392
        %v981 = vunpack.c.l.b16 %v393
        %v982 = vunpack.c.h.b16 %v393
        %v983 = vunpack.c.l.b16 %v394
        %v984 = vunpack.c.h.b16 %v394
        %v985 = vunpack.c.l.b16 %v395
        %v986 = vunpack.c.h.b16 %v395
        %v987 = vunpack.c.l.b16 %v396
        %v988 = vunpack.c.h.b16 %v396
        %v989 = vunpack.c.l.b16 %v397
        %v990 = vunpack.c.h.b16 %v397
        %v991 = vunpack.c.l.b16 %v398
        %v992 = vunpack.c.h.b16 %v398
        %v993 = vunpack.c.l.b16 %v399
        %v994 = vunpack.c.h.b16 %v399
        %v995 = vunpack.c.l.b16 %v400
        %v996 = vunpack.c.h.b16 %v400
        %v997 = vunpack.c.l.b16 %v401
        %v998 = vunpack.c.h.b16 %v401
        %v999 = vunpack.c.l.b16 %v402
        %v1000 = vunpack.c.h.b16 %v402
        %v1001 = vunpack.c.l.b16 %v403
        %v1002 = vunpack.c.h.b16 %v403
        %v1003 = vunpack.c.l.b16 %v404
        %v1004 = vunpack.c.h.b16 %v404
        %v1005 = vunpack.c.l.b16 %v405
        %v1006 = vunpack.c.h.b16 %v405
        %v1007 = vunpack.c.l.b16 %v406
        %v1008 = vunpack.c.h.b16 %v406
        %v1009 = vunpack.c.l.b16 %v407
        %v1010 = vunpack.c.h.b16 %v407
        %v1011 = vunpack.c.l.b16 %v408
        %v1012 = vunpack.c.h.b16 %v408
        %v1013 = vunpack.c.l.b16 %v409
        %v1014 = vunpack.c.h.b16 %v409
        %v1015 = vunpack.c.l.b16 %v410
        %v1016 = vunpack.c.h.b16 %v410
        %v1017 = vunpack.c.l.b16 %v411
        %v1018 = vunpack.c.h.b16 %v411
        %v1019 = vunpack.c.l.b16 %v412
        %v1020 = vunpack.c.h.b16 %v412
        %v1021 = vunpack.c.l.b16 %v413
        %v1022 = vunpack.c.h.b16 %v413
        %v1023 = vunpack.c.l.b16 %v414
        %v1024 = vunpack.c.h.b16 %v414
        %v1025 = vunpack.c.l.b16 %v415
        %v1026 = vunpack.c.h.b16 %v415
        %v1027 = vunpack.c.l.b16 %v416
        %v1028 = vunpack.c.h.b16 %v416
        %v1029 = vunpack.c.l.b16 %v417
        %v1030 = vunpack.c.h.b16 %v417
        %v1031 = vunpack.c.l.b16 %v418
        %v1032 = vunpack.c.h.b16 %v418
        %v1033 = vunpack.c.l.b16 %v419
        %v1034 = vunpack.c.h.b16 %v419
        %v1035 = vunpack.c.l.b16 %v420
        %v1036 = vunpack.c.h.b16 %v420
        %v1037 = vunpack.c.l.b16 %v421
        %v1038 = vunpack.c.h.b16 %v421
        %v1039 = vunpack.c.l.b16 %v422
        %v1040 = vunpack.c.h.b16 %v422
        %v1041 = vunpack.c.l.b16 %v423
        %v1042 = vunpack.c.h.b16 %v423
        %v1043 = vunpack.c.l.b16 %v424
        %v1044 = vunpack.c.h.b16 %v424
        %v1045 = vunpack.c.l.b16 %v425
        %v1046 = vunpack.c.h.b16 %v425
        %v1047 = vunpack.c.l.b16 %v426
        %v1048 = vunpack.c.h.b16 %v426
        %v1049 = vunpack.c.l.b16 %v427
        %v1050 = vunpack.c.h.b16 %v427
        %v1051 = vunpack.c.l.b16 %v428
        %v1052 = vunpack.c.h.b16 %v428
        %v1053 = vunpack.c.l.b16 %v429
        %v1054 = vunpack.c.h.b16 %v429
        %v1055 = vunpack.c.l.b16 %v430
        %v1056 = vunpack.c.h.b16 %v430
        %v1057 = vunpack.c.l.b16 %v431
        %v1058 = vunpack.c.h.b16 %v431
        %v1059 = vunpack.c.l.b16 %v432
        %v1060 = vunpack.c.h.b16 %v432
        %v1061 = vunpack.c.l.b16 %v433
        %v1062 = vunpack.c.h.b16 %v433
        %v1063 = vunpack.c.l.b16 %v434
        %v1064 = vunpack.c.h.b16 %v434
        %v1065 = vunpack.c.l.b16 %v435
        %v1066 = vunpack.c.h.b16 %v435
        %v1067 = vunpack.c.l.b16 %v436
        %v1068 = vunpack.c.h.b16 %v436
        %v1069 = vunpack.c.l.b16 %v437
        %v1070 = vunpack.c.h.b16 %v437
        %v1071 = vunpack.c.l.b16 %v438
        %v1072 = vunpack.c.h.b16 %v438
        %v1073 = vunpack.c.l.b16 %v439
        %v1074 = vunpack.c.h.b16 %v439
        %v1075 = vunpack.c.l.b16 %v440
        %v1076 = vunpack.c.h.b16 %v440
        %v1077 = vunpack.c.l.b16 %v441
        %v1078 = vunpack.c.h.b16 %v441
        %v1079 = vunpack.c.l.b16 %v442
        %v1080 = vunpack.c.h.b16 %v442
        %v1081 = vunpack.c.l.b16 %v443
        %v1082 = vunpack.c.h.b16 %v443
        %v1083 = vunpack.c.l.b16 %v444
        %v1084 = vunpack.c.h.b16 %v444
        %v1085 = vunpack.c.l.b16 %v445
        %v1086 = vunpack.c.h.b16 %v445
        %v1087 = vunpack.c.l.b16 %v446
        %v1088 = vunpack.c.h.b16 %v446
        %v1089 = vunpack.c.l.b16 %v447
        %v1090 = vunpack.c.h.b16 %v447
        %v1091 = vunpack.c.l.b16 %v448
        %v1092 = vunpack.c.h.b16 %v448
        %v1093 = vunpack.c.l.b16 %v449
        %v1094 = vunpack.c.h.b16 %v449
        %v1095 = vunpack.c.l.b16 %v450
        %v1096 = vunpack.c.h.b16 %v450
        %v1097 = vunpack.c.l.b16 %v451
        %v1098 = vunpack.c.h.b16 %v451
        %v1099 = vunpack.c.l.b16 %v452
        %v1100 = vunpack.c.h.b16 %v452
        %v1101 = vunpack.c.l.b16 %v453
        %v1102 = vunpack.c.h.b16 %v453
        %v1103 = vunpack.c.l.b16 %v454
        %v1104 = vunpack.c.h.b16 %v454
        %v1105 = vunpack.c.l.b16 %v455
        %v1106 = vunpack.c.h.b16 %v455
        %v1107 = vunpack.c.l.b16 %v456
        %v1108 = vunpack.c.h.b16 %v456
        %v1109 = vunpack.c.l.b16 %v457
        %v1110 = vunpack.c.h.b16 %v457
        %v1111 = vunpack.c.l.b16 %v458
        %v1112 = vunpack.c.h.b16 %v458
        %v1113 = vunpack.c.l.b16 %v459
        %v1114 = vunpack.c.h.b16 %v459
        %v1115 = vunpack.c.l.b16 %v460
        %v1116 = vunpack.c.h.b16 %v460
        %v1117 = vunpack.c.l.b16 %v461
        %v1118 = vunpack.c.h.b16 %v461
        %v1119 = vunpack.c.l.b16 %v462
        %v1120 = vunpack.c.h.b16 %v462
        %v1121 = vunpack.c.l.b16 %v463
        %v1122 = vunpack.c.h.b16 %v463
        %v1123 = vunpack.c.l.b16 %v464
        %v1124 = vunpack.c.h.b16 %v464
        %v1125 = vunpack.c.l.b16 %v465
        %v1126 = vunpack.c.h.b16 %v465
        %v1127 = vunpack.c.l.b16 %v466
        %v1128 = vunpack.c.h.b16 %v466
        %v1129 = vunpack.c.l.b16 %v467
        %v1130 = vunpack.c.h.b16 %v467
        %v1131 = vunpack.c.l.b16 %v468
        %v1132 = vunpack.c.h.b16 %v468
        %v1133 = vunpack.c.l.b16 %v469
        %v1134 = vunpack.c.h.b16 %v469
        %v1135 = vunpack.c.l.b16 %v470
        %v1136 = vunpack.c.h.b16 %v470
        %v1137 = vunpack.c.l.b16 %v471
        %v1138 = vunpack.c.h.b16 %v471
        %v1139 = vunpack.c.l.b16 %v472
        %v1140 = vunpack.c.h.b16 %v472
        %v1141 = vunpack.c.l.b16 %v473
        %v1142 = vunpack.c.h.b16 %v473
        %v1143 = vunpack.c.l.b16 %v474
        %v1144 = vunpack.c.h.b16 %v474
        %v1145 = vunpack.c.l.b16 %v475
        %v1146 = vunpack.c.h.b16 %v475
        %v1147 = vunpack.c.l.b16 %v476
        %v1148 = vunpack.c.h.b16 %v476
        %v1149 = vunpack.c.l.b16 %v477
        %v1150 = vunpack.c.h.b16 %v477
        %v1151 = vunpack.c.l.b16 %v478
        %v1152 = vunpack.c.h.b16 %v478
        %v1153 = vunpack.c.l.b16 %v479
        %v1154 = vunpack.c.h.b16 %v479
        %v1155 = vunpack.c.l.b16 %v480
        %v1156 = vunpack.c.h.b16 %v480
        %v1157 = vunpack.c.l.b16 %v481
        %v1158 = vunpack.c.h.b16 %v481
        %v1159 = vunpack.c.l.b16 %v482
        %v1160 = vunpack.c.h.b16 %v482
        %v1161 = vunpack.c.l.b16 %v483
        %v1162 = vunpack.c.h.b16 %v483
        %v1163 = vunpack.c.l.b16 %v484
        %v1164 = vunpack.c.h.b16 %v484
        %v1165 = vunpack.c.l.b16 %v485
        %v1166 = vunpack.c.h.b16 %v485
        %v1167 = vunpack.c.l.b16 %v486
        %v1168 = vunpack.c.h.b16 %v486
        %v1169 = vunpack.c.l.b16 %v487
        %v1170 = vunpack.c.h.b16 %v487
        %v1171 = vunpack.c.l.b16 %v488
        %v1172 = vunpack.c.h.b16 %v488
        %v1173 = vunpack.c.l.b16 %v489
        %v1174 = vunpack.c.h.b16 %v489
        %v1175 = vunpack.c.l.b16 %v490
        %v1176 = vunpack.c.h.b16 %v490
        %v1177 = vunpack.c.l.b16 %v491
        %v1178 = vunpack.c.h.b16 %v491
        %v1179 = vunpack.c.l.b16 %v492
        %v1180 = vunpack.c.h.b16 %v492
        %v1181 = vunpack.c.l.b16 %v493
        %v1182 = vunpack.c.h.b16 %v493
        %v1183 = vunpack.c.l.b16 %v494
        %v1184 = vunpack.c.h.b16 %v494
        %v1185 = vunpack.c.l.b16 %v495
        %v1186 = vunpack.c.h.b16 %v495
        %v1187 = vunpack.c.l.b16 %v496
        %v1188 = vunpack.c.h.b16 %v496
        %v1189 = vunpack.c.l.b16 %v497
        %v1190 = vunpack.c.h.b16 %v497
        %v1191 = vunpack.c.l.b16 %v498
        %v1192 = vunpack.c.h.b16 %v498
        %v1193 = vunpack.c.l.b16 %v499
        %v1194 = vunpack.c.h.b16 %v499
        %v1195 = vunpack.c.l.b16 %v500
        %v1196 = vunpack.c.h.b16 %v500
        %v1197 = vunpack.c.l.b16 %v501
        %v1198 = vunpack.c.h.b16 %v501
        %v1199 = vunpack.c.l.b16 %v502
        %v1200 = vunpack.c.h.b16 %v502
        %v1201 = vunpack.c.l.b16 %v503
        %v1202 = vunpack.c.h.b16 %v503
        %v1203 = vunpack.c.l.b16 %v504
        %v1204 = vunpack.c.h.b16 %v504
        %v1205 = vunpack.c.l.b16 %v505
        %v1206 = vunpack.c.h.b16 %v505
        %v1207 = vunpack.c.l.b16 %v506
        %v1208 = vunpack.c.h.b16 %v506
        %v1209 = vunpack.c.l.b16 %v507
        %v1210 = vunpack.c.h.b16 %v507
        %v1211 = vunpack.c.l.b16 %v508
        %v1212 = vunpack.c.h.b16 %v508
        %v1213 = vunpack.c.l.b16 %v509
        %v1214 = vunpack.c.h.b16 %v509
        %v1215 = vunpack.c.l.b16 %v510
        %v1216 = vunpack.c.h.b16 %v510
        %v1217 = vunpack.c.l.b16 %v511
        %v1218 = vunpack.c.h.b16 %v511
        %v1219 = vunpack.c.l.b16 %v512
        %v1220 = vunpack.c.h.b16 %v512
        %v1221 = vunpack.c.l.b16 %v513
        %v1222 = vunpack.c.h.b16 %v513
        %v1223 = vunpack.c.l.b16 %v514
        %v1224 = vunpack.c.h.b16 %v514
        %v1225 = vunpack.c.l.b16 %v515
        %v1226 = vunpack.c.h.b16 %v515
        %v1227 = vunpack.c.l.b16 %v516
        %v1228 = vunpack.c.h.b16 %v516
        %v1229 = vunpack.c.l.b16 %v517
        %v1230 = vunpack.c.h.b16 %v517
        %v1231 = vunpack.c.l.b16 %v518
        %v1232 = vunpack.c.h.b16 %v518
        %v1233 = vunpack.c.l.b16 %v519
        %v1234 = vunpack.c.h.b16 %v519
        %v1235 = vunpack.c.l.b16 %v520
        %v1236 = vunpack.c.h.b16 %v520
        %v1237 = vunpack.c.l.b16 %v521
        %v1238 = vunpack.c.h.b16 %v521
        %v1239 = vunpack.c.l.b16 %v522
        %v1240 = vunpack.c.h.b16 %v522
        %v1241 = vunpack.c.l.b16 %v523
        %v1242 = vunpack.c.h.b16 %v523
        %v1243 = vunpack.c.l.b16 %v524
        %v1244 = vunpack.c.h.b16 %v524
        %v1245 = vunpack.c.l.b16 %v525
        %v1246 = vunpack.c.h.b16 %v525
        %v1247 = vunpack.c.l.b16 %v526
        %v1248 = vunpack.c.h.b16 %v526
        %v1249 = vunpack.c.l.b16 %v527
        %v1250 = vunpack.c.h.b16 %v527
        %v1251 = vunpack.c.l.b16 %v528
        %v1252 = vunpack.c.h.b16 %v528
        %v1253 = vunpack.c.l.b16 %v529
        %v1254 = vunpack.c.h.b16 %v529
        %v1255 = vunpack.c.l.b16 %v530
        %v1256 = vunpack.c.h.b16 %v530
        %v1257 = vunpack.c.l.b16 %v531
        %v1258 = vunpack.c.h.b16 %v531
        %v1259 = vunpack.c.l.b16 %v532
        %v1260 = vunpack.c.h.b16 %v532
        %v1261 = vunpack.c.l.b16 %v533
        %v1262 = vunpack.c.h.b16 %v533
        %v1263 = vunpack.c.l.b16 %v534
        %v1264 = vunpack.c.h.b16 %v534
        %v1265 = vunpack.c.l.b16 %v535
        %v1266 = vunpack.c.h.b16 %v535
        %v1267 = vunpack.c.l.b16 %v536
        %v1268 = vunpack.c.h.b16 %v536
        %v1269 = vunpack.c.l.b16 %v537
        %v1270 = vunpack.c.h.b16 %v537
        %v1271 = vunpack.c.l.b16 %v538
        %v1272 = vunpack.c.h.b16 %v538
        %v1273 = vunpack.c.l.b16 %v539
        %v1274 = vunpack.c.h.b16 %v539
        %v1275 = vunpack.c.l.b16 %v540
        %v1276 = vunpack.c.h.b16 %v540
        %v1277 = vunpack.c.l.b16 %v541
        %v1278 = vunpack.c.h.b16 %v541
        %v1279 = vunpack.c.l.b16 %v542
        %v1280 = vunpack.c.h.b16 %v542
        %v1281 = vunpack.c.l.b16 %v543
        %v1282 = vunpack.c.h.b16 %v543
        %v1283 = vunpack.c.l.b16 %v544
        %v1284 = vunpack.c.h.b16 %v544
        %v1285 = vunpack.c.l.b16 %v545
        %v1286 = vunpack.c.h.b16 %v545
        %v1287 = vunpack.c.l.b16 %v546
        %v1288 = vunpack.c.h.b16 %v546
        %v1289 = vunpack.c.l.b16 %v547
        %v1290 = vunpack.c.h.b16 %v547
        %v1291 = vunpack.c.l.b16 %v548
        %v1292 = vunpack.c.h.b16 %v548
        %v1293 = vunpack.c.l.b16 %v549
        %v1294 = vunpack.c.h.b16 %v549
        %v1295 = vunpack.c.l.b16 %v550
        %v1296 = vunpack.c.h.b16 %v550
        %v1297 = vunpack.c.l.b16 %v551
        %v1298 = vunpack.c.h.b16 %v551
        %v1299 = vunpack.c.l.b16 %v552
        %v1300 = vunpack.c.h.b16 %v552
        %v1301 = vunpack.c.l.b16 %v553
        %v1302 = vunpack.c.h.b16 %v553
        %v1303 = vunpack.c.l.b16 %v554
        %v1304 = vunpack.c.h.b16 %v554
        %v1305 = vunpack.c.l.b16 %v555
        %v1306 = vunpack.c.h.b16 %v555
        %v1307 = vunpack.c.l.b16 %v556
        %v1308 = vunpack.c.h.b16 %v556
        %v1309 = vunpack.c.l.b16 %v557
        %v1310 = vunpack.c.h.b16 %v557
        %v1311 = vunpack.c.l.b16 %v558
        %v1312 = vunpack.c.h.b16 %v558
        %v1313 = vunpack.c.l.b16 %v559
        %v1314 = vunpack.c.h.b16 %v559
        %v1315 = vunpack.c.l.b16 %v560
        %v1316 = vunpack.c.h.b16 %v560
        %v1317 = vunpack.c.l.b16 %v561
        %v1318 = vunpack.c.h.b16 %v561
        %v1319 = vunpack.c.l.b16 %v562
        %v1320 = vunpack.c.h.b16 %v562
        %v1321 = vunpack.c.l.b16 %v563
        %v1322 = vunpack.c.h.b16 %v563
        %v1323 = vunpack.c.l.b16 %v564
        %v1324 = vunpack.c.h.b16 %v564
        %v1325 = vunpack.c.l.b16 %v565
        %v1326 = vunpack.c.h.b16 %v565
        %v1327 = vunpack.c.l.b16 %v566
        %v1328 = vunpack.c.h.b16 %v566
        %v1329 = vunpack.c.l.b16 %v567
        %v1330 = vunpack.c.h.b16 %v567
        %v1331 = vunpack.c.l.b16 %v568
        %v1332 = vunpack.c.h.b16 %v568
        %v1333 = vunpack.c.l.b16 %v569
        %v1334 = vunpack.c.h.b16 %v569
        %v1335 = vunpack.c.l.b16 %v570
        %v1336 = vunpack.c.h.b16 %v570
        %v1337 = vunpack.c.l.b16 %v571
        %v1338 = vunpack.c.h.b16 %v571
        %v1339 = vunpack.c.l.b16 %v572
        %v1340 = vunpack.c.h.b16 %v572
        %v1341 = vunpack.c.l.b16 %v573
        %v1342 = vunpack.c.h.b16 %v573
        %v1343 = vunpack.c.l.b16 %v574
        %v1344 = vunpack.c.h.b16 %v574
        %v1345 = vunpack.c.l.b16 %v575
        %v1346 = vunpack.c.h.b16 %v575
        %v1347 = vunpack.c.l.b16 %v576
        %v1348 = vunpack.c.h.b16 %v576
        %v1349 = vunpack.c.l.b16 %v577
        %v1350 = vunpack.c.h.b16 %v577
        %v1351 = vunpack.c.l.b16 %v578
        %v1352 = vunpack.c.h.b16 %v578
        %v1353 = vunpack.c.l.b16 %v579
        %v1354 = vunpack.c.h.b16 %v579
        %v1355 = vunpack.c.l.b16 %v580
        %v1356 = vunpack.c.h.b16 %v580
        %v1357 = vunpack.c.l.b16 %v581
        %v1358 = vunpack.c.h.b16 %v581
        %v1359 = vunpack.c.l.b16 %v582
        %v1360 = vunpack.c.h.b16 %v582
        %v1361 = vunpack.c.l.b16 %v583
        %v1362 = vunpack.c.h.b16 %v583
        %v1363 = vunpack.c.l.b16 %v584
        %v1364 = vunpack.c.h.b16 %v584
        %v1365 = vunpack.c.l.b16 %v585
        %v1366 = vunpack.c.h.b16 %v585
        %v1367 = vunpack.c.l.b16 %v586
        %v1368 = vunpack.c.h.b16 %v586
        %v1369 = vunpack.c.l.b16 %v587
        %v1370 = vunpack.c.h.b16 %v587
        %v1371 = vunpack.c.l.b16 %v588
        %v1372 = vunpack.c.h.b16 %v588
        %v1373 = vunpack.c.l.b16 %v589
        %v1374 = vunpack.c.h.b16 %v589
        %v1375 = vunpack.c.l.b16 %v590
        %v1376 = vunpack.c.h.b16 %v590
        %v1377 = vunpack.c.l.b16 %v591
        %v1378 = vunpack.c.h.b16 %v591
        %v1379 = vunpack.c.l.b16 %v592
        %v1380 = vunpack.c.h.b16 %v592
        %v1381 = vunpack.c.l.b16 %v593
        %v1382 = vunpack.c.h.b16 %v593
        %v1383 = vunpack.c.l.b16 %v594
        %v1384 = vunpack.c.h.b16 %v594
        %v1385 = vunpack.c.l.b16 %v595
        %v1386 = vunpack.c.h.b16 %v595
        %v1387 = vunpack.c.l.b16 %v596
        %v1388 = vunpack.c.h.b16 %v596
        %v1389 = vunpack.c.l.b16 %v597
        %v1390 = vunpack.c.h.b16 %v597
        %v1391 = vunpack.c.l.b16 %v598
        %v1392 = vunpack.c.h.b16 %v598
        %v1393 = vunpack.c.l.b16 %v599
        %v1394 = vunpack.c.h.b16 %v599
        %v1395 = vunpack.c.l.b16 %v600
        %v1396 = vunpack.c.h.b16 %v600
        %v1397 = vunpack.c.l.b16 %v601
        %v1398 = vunpack.c.h.b16 %v601
        %v1399 = vunpack.c.l.b16 %v602
        %v1400 = vunpack.c.h.b16 %v602
        %v1401 = vunpack.c.l.b16 %v603
        %v1402 = vunpack.c.h.b16 %v603
        %v1403 = vunpack.c.l.b16 %v604
        %v1404 = vunpack.c.h.b16 %v604
        %v1405 = vunpack.c.l.b16 %v605
        %v1406 = vunpack.c.h.b16 %v605
        %v1407 = vunpack.c.l.b16 %v606
        %v1408 = vunpack.c.h.b16 %v606
        %v1409 = vunpack.c.l.b16 %v607
        %v1410 = vunpack.c.h.b16 %v607
        %v1411 = vunpack.c.l.b16 %v608
        %v1412 = vunpack.c.h.b16 %v608
        %v1413 = vunpack.c.l.b16 %v609
        %v1414 = vunpack.c.h.b16 %v609
        %v1415 = vunpack.c.l.b16 %v610
        %v1416 = vunpack.c.h.b16 %v610
        %v1417 = vunpack.c.l.b16 %v611
        %v1418 = vunpack.c.h.b16 %v611
        %v1419 = vunpack.c.l.b16 %v612
        %v1420 = vunpack.c.h.b16 %v612
        %v1421 = vunpack.c.l.b16 %v613
        %v1422 = vunpack.c.h.b16 %v613
        %v1423 = vunpack.c.l.b16 %v614
        %v1424 = vunpack.c.h.b16 %v614
        %v1425 = vunpack.c.l.b16 %v615
        %v1426 = vunpack.c.h.b16 %v615
        %v1427 = vunpack.c.l.b16 %v616
        %v1428 = vunpack.c.h.b16 %v616
        %v1429 = vunpack.c.l.b16 %v617
        %v1430 = vunpack.c.h.b16 %v617
        %v1431 = vunpack.c.l.b16 %v618
        %v1432 = vunpack.c.h.b16 %v618
        %v1433 = vunpack.c.l.b16 %v619
        %v1434 = vunpack.c.h.b16 %v619
        %v1435 = vunpack.c.l.b16 %v620
        %v1436 = vunpack.c.h.b16 %v620
        %v1437 = vunpack.c.l.b16 %v621
        %v1438 = vunpack.c.h.b16 %v621
        %v1439 = vunpack.c.l.b16 %v622
        %v1440 = vunpack.c.h.b16 %v622
        %v1441 = vpack.c.b16 %v963, %v961
        %v1442 = vpack.c.b16 %v964, %v962
        %v1443 = vpack.c.b16 %v967, %v965
        %v1444 = vpack.c.b16 %v968, %v966
        %v1445 = vpack.c.b16 %v971, %v969
        %v1446 = vpack.c.b16 %v972, %v970
        %v1447 = vpack.c.b16 %v975, %v973
        %v1448 = vpack.c.b16 %v976, %v974
        %v1449 = vpack.c.b16 %v979, %v977
        %v1450 = vpack.c.b16 %v980, %v978
        %v1451 = vpack.c.b16 %v983, %v981
        %v1452 = vpack.c.b16 %v984, %v982
        %v1453 = vpack.c.b16 %v987, %v985
        %v1454 = vpack.c.b16 %v988, %v986
        %v1455 = vpack.c.b16 %v991, %v989
        %v1456 = vpack.c.b16 %v992, %v990
        %v1457 = vpack.c.b16 %v995, %v993
        %v1458 = vpack.c.b16 %v996, %v994
        %v1459 = vpack.c.b16 %v999, %v997
        %v1460 = vpack.c.b16 %v1000, %v998
        %v1461 = vpack.c.b16 %v1003, %v1001
        %v1462 = vpack.c.b16 %v1004, %v1002
        %v1463 = vpack.c.b16 %v1007, %v1005
        %v1464 = vpack.c.b16 %v1008, %v1006
        %v1465 = vpack.c.b16 %v1011, %v1009
        %v1466 = vpack.c.b16 %v1012, %v1010
        %v1467 = vpack.c.b16 %v1015, %v1013
        %v1468 = vpack.c.b16 %v1016, %v1014
        %v1469 = vpack.c.b16 %v1019, %v1017
        %v1470 = vpack.c.b16 %v1020, %v1018
        %v1471 = vpack.c.b16 %v1023, %v1021
        %v1472 = vpack.c.b16 %v1024, %v1022
        %v1473 = vpack.c.b16 %v1027, %v1025
        %v1474 = vpack.c.b16 %v1028, %v1026
        %v1475 = vpack.c.b16 %v1031, %v1029
        %v1476 = vpack.c.b16 %v1032, %v1030
        %v1477 = vpack.c.b16 %v1035, %v1033
        %v1478 = vpack.c.b16 %v1036, %v1034
        %v1479 = vpack.c.b16 %v1039, %v1037
        %v1480 = vpack.c.b16 %v1040, %v1038
        %v1481 = vpack.c.b16 %v1043, %v1041
        %v1482 = vpack.c.b16 %v1044, %v1042
        %v1483 = vpack.c.b16 %v1047, %v1045
        %v1484 = vpack.c.b16 %v1048, %v1046
        %v1485 = vpack.c.b16 %v1051, %v1049
        %v1486 = vpack.c.b16 %v1052, %v1050
        %v1487 = vpack.c.b16 %v1055, %v1053
        %v1488 = vpack.c.b16 %v1056, %v1054
        %v1489 = vpack.c.b16 %v1059, %v1057
        %v1490 = vpack.c.b16 %v1060, %v1058
        %v1491 = vpack.c.b16 %v1063, %v1061
        %v1492 = vpack.c.b16 %v1064, %v1062
        %v1493 = vpack.c.b16 %v1067, %v1065
        %v1494 = vpack.c.b16 %v1068, %v1066
        %v1495 = vpack.c.b16 %v1071, %v1069
        %v1496 = vpack.c.b16 %v1072, %v1070
        %v1497 = vpack.c.b16 %v1075, %v1073
        %v1498 = vpack.c.b16 %v1076, %v1074
        %v1499 = vpack.c.b16 %v1079, %v1077
        %v1500 = vpack.c.b16 %v1080, %v1078
        %v1501 = vpack.c.b16 %v1083, %v1081
        %v1502 = vpack.c.b16 %v1084, %v1082
        %v1503 = vpack.c.b16 %v1087, %v1085
        %v1504 = vpack.c.b16 %v1088, %v1086
        %v1505 = vpack.c.b16 %v1091, %v1089
        %v1506 = vpack.c.b16 %v1092, %v1090
        %v1507 = vpack.c.b16 %v1095, %v1093
        %v1508 = vpack.c.b16 %v1096, %v1094
        %v1509 = vpack.c.b16 %v1099, %v1097
        %v1510 = vpack.c.b16 %v1100, %v1098
        %v1511 = vpack.c.b16 %v1103, %v1101
        %v1512 = vpack.c.b16 %v1104, %v1102
        %v1513 = vpack.c.b16 %v1107, %v1105
        %v1514 = vpack.c.b16 %v1108, %v1106
        %v1515 = vpack.c.b16 %v1111, %v1109
        %v1516 = vpack.c.b16 %v1112, %v1110
        %v1517 = vpack.c.b16 %v1115, %v1113
        %v1518 = vpack.c.b16 %v1116, %v1114
        %v1519 = vpack.c.b16 %v1119, %v1117
        %v1520 = vpack.c.b16 %v1120, %v1118
        %v1521 = vpack.c.b16 %v1123, %v1121
        %v1522 = vpack.c.b16 %v1124, %v1122
        %v1523 = vpack.c.b16 %v1127, %v1125
        %v1524 = vpack.c.b16 %v1128, %v1126
        %v1525 = vpack.c.b16 %v1131, %v1129
        %v1526 = vpack.c.b16 %v1132, %v1130
        %v1527 = vpack.c.b16 %v1135, %v1133
        %v1528 = vpack.c.b16 %v1136, %v1134
        %v1529 = vpack.c.b16 %v1139, %v1137
        %v1530 = vpack.c.b16 %v1140, %v1138
        %v1531 = vpack.c.b16 %v1143, %v1141
        %v1532 = vpack.c.b16 %v1144, %v1142
        %v1533 = vpack.c.b16 %v1147, %v1145
        %v1534 = vpack.c.b16 %v1148, %v1146
        %v1535 = vpack.c.b16 %v1151, %v1149
        %v1536 = vpack.c.b16 %v1152, %v1150
        %v1537 = vpack.c.b16 %v1155, %v1153
        %v1538 = vpack.c.b16 %v1156, %v1154
        %v1539 = vpack.c.b16 %v1159, %v1157
        %v1540 = vpack.c.b16 %v1160, %v1158
        %v1541 = vpack.c.b16 %v1163, %v1161
        %v1542 = vpack.c.b16 %v1164, %v1162
        %v1543 = vpack.c.b16 %v1167, %v1165
        %v1544 = vpack.c.b16 %v1168, %v1166
        %v1545 = vpack.c.b16 %v1171, %v1169
        %v1546 = vpack.c.b16 %v1172, %v1170
        %v1547 = vpack.c.b16 %v1175, %v1173
        %v1548 = vpack.c.b16 %v1176, %v1174
        %v1549 = vpack.c.b16 %v1179, %v1177
        %v1550 = vpack.c.b16 %v1180, %v1178
        %v1551 = vpack.c.b16 %v1183, %v1181
        %v1552 = vpack.c.b16 %v1184, %v1182
        %v1553 = vpack.c.b16 %v1187, %v1185
        %v1554 = vpack.c.b16 %v1188, %v1186
        %v1555 = vpack.c.b16 %v1191, %v1189
        %v1556 = vpack.c.b16 %v1192, %v1190
        %v1557 = vpack.c.b16 %v1195, %v1193
        %v1558 = vpack.c.b16 %v1196, %v1194
        %v1559 = vpack.c.b16 %v1199, %v1197
        %v1560 = vpack.c.b16 %v1200, %v1198
        %v1561 = vpack.c.b16 %v1203, %v1201
        %v1562 = vpack.c.b16 %v1204, %v1202
        %v1563 = vpack.c.b16 %v1207, %v1205
        %v1564 = vpack.c.b16 %v1208, %v1206
        %v1565 = vpack.c.b16 %v1211, %v1209
        %v1566 = vpack.c.b16 %v1212, %v1210
        %v1567 = vpack.c.b16 %v1215, %v1213
        %v1568 = vpack.c.b16 %v1216, %v1214
        %v1569 = vpack.c.b16 %v1219, %v1217
        %v1570 = vpack.c.b16 %v1220, %v1218
        %v1571 = vpack.c.b16 %v1223, %v1221
        %v1572 = vpack.c.b16 %v1224, %v1222
        %v1573 = vpack.c.b16 %v1227, %v1225
        %v1574 = vpack.c.b16 %v1228, %v1226
        %v1575 = vpack.c.b16 %v1231, %v1229
        %v1576 = vpack.c.b16 %v1232, %v1230
        %v1577 = vpack.c.b16 %v1235, %v1233
        %v1578 = vpack.c.b16 %v1236, %v1234
        %v1579 = vpack.c.b16 %v1239, %v1237
        %v1580 = vpack.c.b16 %v1240, %v1238
        %v1581 = vpack.c.b16 %v1243, %v1241
        %v1582 = vpack.c.b16 %v1244, %v1242
        %v1583 = vpack.c.b16 %v1247, %v1245
        %v1584 = vpack.c.b16 %v1248, %v1246
        %v1585 = vpack.c.b16 %v1251, %v1249
        %v1586 = vpack.c.b16 %v1252, %v1250
        %v1587 = vpack.c.b16 %v1255, %v1253
        %v1588 = vpack.c.b16 %v1256, %v1254
        %v1589 = vpack.c.b16 %v1259, %v1257
        %v1590 = vpack.c.b16 %v1260, %v1258
        %v1591 = vpack.c.b16 %v1263, %v1261
        %v1592 = vpack.c.b16 %v1264, %v1262
        %v1593 = vpack.c.b16 %v1267, %v1265
        %v1594 = vpack.c.b16 %v1268, %v1266
        %v1595 = vpack.c.b16 %v1271, %v1269
        %v1596 = vpack.c.b16 %v1272, %v1270
        %v1597 = vpack.c.b16 %v1275, %v1273
        %v1598 = vpack.c.b16 %v1276, %v1274
        %v1599 = vpack.c.b16 %v1279, %v1277
        %v1600 = vpack.c.b16 %v1280, %v1278
        %v1601 = vpack.c.b16 %v1283, %v1281
        %v1602 = vpack.c.b16 %v1284, %v1282
        %v1603 = vpack.c.b16 %v1287, %v1285
        %v1604 = vpack.c.b16 %v1288, %v1286
        %v1605 = vpack.c.b16 %v1291, %v1289
        %v1606 = vpack.c.b16 %v1292, %v1290
        %v1607 = vpack.c.b16 %v1295, %v1293
        %v1608 = vpack.c.b16 %v1296, %v1294
        %v1609 = vpack.c.b16 %v1299, %v1297
        %v1610 = vpack.c.b16 %v1300, %v1298
        %v1611 = vpack.c.b16 %v1303, %v1301
        %v1612 = vpack.c.b16 %v1304, %v1302
        %v1613 = vpack.c.b16 %v1307, %v1305
        %v1614 = vpack.c.b16 %v1308, %v1306
        %v1615 = vpack.c.b16 %v1311, %v1309
        %v1616 = vpack.c.b16 %v1312, %v1310
        %v1617 = vpack.c.b16 %v1315, %v1313
        %v1618 = vpack.c.b16 %v1316, %v1314
        %v1619 = vpack.c.b16 %v1319, %v1317
        %v1620 = vpack.c.b16 %v1320, %v1318
        %v1621 = vpack.c.b16 %v1323, %v1321
        %v1622 = vpack.c.b16 %v1324, %v1322
        %v1623 = vpack.c.b16 %v1327, %v1325
        %v1624 = vpack.c.b16 %v1328, %v1326
        %v1625 = vpack.c.b16 %v1331, %v1329
        %v1626 = vpack.c.b16 %v1332, %v1330
        %v1627 = vpack.c.b16 %v1335, %v1333
        %v1628 = vpack.c.b16 %v1336, %v1334
        %v1629 = vpack.c.b16 %v1339, %v1337
        %v1630 = vpack.c.b16 %v1340, %v1338
        %v1631 = vpack.c.b16 %v1343, %v1341
        %v1632 = vpack.c.b16 %v1344, %v1342
        %v1633 = vpack.c.b16 %v1347, %v1345
        %v1634 = vpack.c.b16 %v1348, %v1346
        %v1635 = vpack.c.b16 %v1351, %v1349
        %v1636 = vpack.c.b16 %v1352, %v1350
        %v1637 = vpack.c.b16 %v1355, %v1353
        %v1638 = vpack.c.b16 %v1356, %v1354
        %v1639 = vpack.c.b16 %v1359, %v1357
        %v1640 = vpack.c.b16 %v1360, %v1358
        %v1641 = vpack.c.b16 %v1363, %v1361
        %v1642 = vpack.c.b16 %v1364, %v1362
        %v1643 = vpack.c.b16 %v1367, %v1365
        %v1644 = vpack.c.b16 %v1368, %v1366
        %v1645 = vpack.c.b16 %v1371, %v1369
        %v1646 = vpack.c.b16 %v1372, %v1370
        %v1647 = vpack.c.b16 %v1375, %v1373
        %v1648 = vpack.c.b16 %v1376, %v1374
        %v1649 = vpack.c.b16 %v1379, %v1377
        %v1650 = vpack.c.b16 %v1380, %v1378
        %v1651 = vpack.c.b16 %v1383, %v1381
        %v1652 = vpack.c.b16 %v1384, %v1382
        %v1653 = vpack.c.b16 %v1387, %v1385
        %v1654 = vpack.c.b16 %v1388, %v1386
        %v1655 = vpack.c.b16 %v1391, %v1389
        %v1656 = vpack.c.b16 %v1392, %v1390
        %v1657 = vpack.c.b16 %v1395, %v1393
        %v1658 = vpack.c.b16 %v1396, %v1394
        %v1659 = vpack.c.b16 %v1399, %v1397
        %v1660 = vpack.c.b16 %v1400, %v1398
        %v1661 = vpack.c.b16 %v1403, %v1401
        %v1662 = vpack.c.b16 %v1404, %v1402
        %v1663 = vpack.c.b16 %v1407, %v1405
        %v1664 = vpack.c.b16 %v1408, %v1406
        %v1665 = vpack.c.b16 %v1411, %v1409
        %v1666 = vpack.c.b16 %v1412, %v1410
        %v1667 = vpack.c.b16 %v1415, %v1413
        %v1668 = vpack.c.b16 %v1416, %v1414
        %v1669 = vpack.c.b16 %v1419, %v1417
        %v1670 = vpack.c.b16 %v1420, %v1418
        %v1671 = vpack.c.b16 %v1423, %v1421
        %v1672 = vpack.c.b16 %v1424, %v1422
        %v1673 = vpack.c.b16 %v1427, %v1425
        %v1674 = vpack.c.b16 %v1428, %v1426
        %v1675 = vpack.c.b16 %v1431, %v1429
        %v1676 = vpack.c.b16 %v1432, %v1430
        %v1677 = vpack.c.b16 %v1435, %v1433
        %v1678 = vpack.c.b16 %v1436, %v1434
        %v1679 = vpack.c.b16 %v1439, %v1437
        %v1680 = vpack.c.b16 %v1440, %v1438
        %1921 = vmatpush.bf16.msra.mxu0 %v1455
        %1922 = vmatpush.bf16.msra.mxu0 %v1453
        %1923 = vmatpush.bf16.msra.mxu0 %v1451
        %1924 = vmatpush.bf16.msra.mxu0 %v1449
        %1925 = vmatpush.bf16.msra.mxu0 %v1447
        %1926 = vmatpush.bf16.msra.mxu0 %v1445
        %1927 = vmatpush.bf16.msra.mxu0 %v1443
        %1928 = vmatpush.bf16.msra.mxu0 %v1441
        %1929 = vmatmul.bf16.gmra.mxu0 %v691
        %v1930 = vpop.f32.mrf.mxu0
        %v1931 = vadd.f32 %v641, %v1930
        %v1932 = vpop.f32.mrf.mxu0
        %v1933 = vadd.f32 %v641, %v1932
        %1934 = vdwg.mxu0
        %1935 = vmatpush.bf16.msra.mxu0 %v1471
        %1936 = vmatpush.bf16.msra.mxu0 %v1469
        %1937 = vmatpush.bf16.msra.mxu0 %v1467
        %1938 = vmatpush.bf16.msra.mxu0 %v1465
        %1939 = vmatpush.bf16.msra.mxu0 %v1463
        %1940 = vmatpush.bf16.msra.mxu0 %v1461
        %1941 = vmatpush.bf16.msra.mxu0 %v1459
        %1942 = vmatpush.bf16.msra.mxu0 %v1457
        %1943 = vmatmul.bf16.gmra.mxu0 %v692
        %v1944 = vpop.f32.mrf.mxu0
        %v1945 = vadd.f32 %v1931, %v1944
        %v1946 = vpop.f32.mrf.mxu0
        %v1947 = vadd.f32 %v1933, %v1946
        %1948 = vdwg.mxu0
        %1949 = vmatpush.bf16.msra.mxu0 %v1487
        %1950 = vmatpush.bf16.msra.mxu0 %v1485
        %1951 = vmatpush.bf16.msra.mxu0 %v1483
        %1952 = vmatpush.bf16.msra.mxu0 %v1481
        %1953 = vmatpush.bf16.msra.mxu0 %v1479
        %1954 = vmatpush.bf16.msra.mxu0 %v1477
        %1955 = vmatpush.bf16.msra.mxu0 %v1475
        %1956 = vmatpush.bf16.msra.mxu0 %v1473
        %1957 = vmatmul.bf16.gmra.mxu0 %v693
        %v1958 = vpop.f32.mrf.mxu0
        %v1959 = vadd.f32 %v1945, %v1958
        %v1960 = vpop.f32.mrf.mxu0
        %v1961 = vadd.f32 %v1947, %v1960
        %1962 = vdwg.mxu0
        %1963 = vmatpush.bf16.msra.mxu0 %v1503
        %1964 = vmatpush.bf16.msra.mxu0 %v1501
        %1965 = vmatpush.bf16.msra.mxu0 %v1499
        %1966 = vmatpush.bf16.msra.mxu0 %v1497
        %1967 = vmatpush.bf16.msra.mxu0 %v1495
        %1968 = vmatpush.bf16.msra.mxu0 %v1493
        %1969 = vmatpush.bf16.msra.mxu0 %v1491
        %1970 = vmatpush.bf16.msra.mxu0 %v1489
        %1971 = vmatmul.bf16.gmra.mxu0 %v694
        %v1972 = vpop.f32.mrf.mxu0
        %v1973 = vadd.f32 %v1959, %v1972
        %v1974 = vpop.f32.mrf.mxu0
        %v1975 = vadd.f32 %v1961, %v1974
        %1976 = vdwg.mxu0
        %1977 = vmatpush.bf16.msra.mxu0 %v1519
        %1978 = vmatpush.bf16.msra.mxu0 %v1517
        %1979 = vmatpush.bf16.msra.mxu0 %v1515
        %1980 = vmatpush.bf16.msra.mxu0 %v1513
        %1981 = vmatpush.bf16.msra.mxu0 %v1511
        %1982 = vmatpush.bf16.msra.mxu0 %v1509
        %1983 = vmatpush.bf16.msra.mxu0 %v1507
        %1984 = vmatpush.bf16.msra.mxu0 %v1505
        %1985 = vmatmul.bf16.gmra.mxu0 %v695
        %v1986 = vpop.f32.mrf.mxu0
        %v1987 = vadd.f32 %v1973, %v1986
        %v1988 = vpop.f32.mrf.mxu0
        %v1989 = vadd.f32 %v1975, %v1988
        %1990 = vdwg.mxu0
        %1991 = vmatpush.bf16.msra.mxu0 %v1535
        %1992 = vmatpush.bf16.msra.mxu0 %v1533
        %1993 = vmatpush.bf16.msra.mxu0 %v1531
        %1994 = vmatpush.bf16.msra.mxu0 %v1529
        %1995 = vmatpush.bf16.msra.mxu0 %v1527
        %1996 = vmatpush.bf16.msra.mxu0 %v1525
        %1997 = vmatpush.bf16.msra.mxu0 %v1523
        %1998 = vmatpush.bf16.msra.mxu0 %v1521
        %1999 = vmatmul.bf16.gmra.mxu0 %v696
        %v2000 = vpop.f32.mrf.mxu0
        %v2001 = vadd.f32 %v1987, %v2000
        %v2002 = vpop.f32.mrf.mxu0
        %v2003 = vadd.f32 %v1989, %v2002
        %2004 = vdwg.mxu0
        %2005 = vmatpush.bf16.msra.mxu0 %v1551
        %2006 = vmatpush.bf16.msra.mxu0 %v1549
        %2007 = vmatpush.bf16.msra.mxu0 %v1547
        %2008 = vmatpush.bf16.msra.mxu0 %v1545
        %2009 = vmatpush.bf16.msra.mxu0 %v1543
        %2010 = vmatpush.bf16.msra.mxu0 %v1541
        %2011 = vmatpush.bf16.msra.mxu0 %v1539
        %2012 = vmatpush.bf16.msra.mxu0 %v1537
        %2013 = vmatmul.bf16.gmra.mxu0 %v697
        %v2014 = vpop.f32.mrf.mxu0
        %v2015 = vadd.f32 %v2001, %v2014
        %v2016 = vpop.f32.mrf.mxu0
        %v2017 = vadd.f32 %v2003, %v2016
        %2018 = vdwg.mxu0
        %2019 = vmatpush.bf16.msra.mxu0 %v1567
        %2020 = vmatpush.bf16.msra.mxu0 %v1565
        %2021 = vmatpush.bf16.msra.mxu0 %v1563
        %2022 = vmatpush.bf16.msra.mxu0 %v1561
        %2023 = vmatpush.bf16.msra.mxu0 %v1559
        %2024 = vmatpush.bf16.msra.mxu0 %v1557
        %2025 = vmatpush.bf16.msra.mxu0 %v1555
        %2026 = vmatpush.bf16.msra.mxu0 %v1553
        %2027 = vmatmul.bf16.gmra.mxu0 %v698
        %v2028 = vpop.f32.mrf.mxu0
        %v2029 = vadd.f32 %v2015, %v2028
        %v2030 = vpop.f32.mrf.mxu0
        %v2031 = vadd.f32 %v2017, %v2030
        %2032 = vdwg.mxu0
        %2033 = vmatpush.bf16.msra.mxu0 %v1583
        %2034 = vmatpush.bf16.msra.mxu0 %v1581
        %2035 = vmatpush.bf16.msra.mxu0 %v1579
        %2036 = vmatpush.bf16.msra.mxu0 %v1577
        %2037 = vmatpush.bf16.msra.mxu0 %v1575
        %2038 = vmatpush.bf16.msra.mxu0 %v1573
        %2039 = vmatpush.bf16.msra.mxu0 %v1571
        %2040 = vmatpush.bf16.msra.mxu0 %v1569
        %2041 = vmatmul.bf16.gmra.mxu0 %v699
        %v2042 = vpop.f32.mrf.mxu0
        %v2043 = vadd.f32 %v2029, %v2042
        %v2044 = vpop.f32.mrf.mxu0
        %v2045 = vadd.f32 %v2031, %v2044
        %2046 = vdwg.mxu0
        %2047 = vmatpush.bf16.msra.mxu0 %v1599
        %2048 = vmatpush.bf16.msra.mxu0 %v1597
        %2049 = vmatpush.bf16.msra.mxu0 %v1595
        %2050 = vmatpush.bf16.msra.mxu0 %v1593
        %2051 = vmatpush.bf16.msra.mxu0 %v1591
        %2052 = vmatpush.bf16.msra.mxu0 %v1589
        %2053 = vmatpush.bf16.msra.mxu0 %v1587
        %2054 = vmatpush.bf16.msra.mxu0 %v1585
        %2055 = vmatmul.bf16.gmra.mxu0 %v700
        %v2056 = vpop.f32.mrf.mxu0
        %v2057 = vadd.f32 %v2043, %v2056
        %v2058 = vpop.f32.mrf.mxu0
        %v2059 = vadd.f32 %v2045, %v2058
        %2060 = vdwg.mxu0
        %2061 = vmatpush.bf16.msra.mxu0 %v1615
        %2062 = vmatpush.bf16.msra.mxu0 %v1613
        %2063 = vmatpush.bf16.msra.mxu0 %v1611
        %2064 = vmatpush.bf16.msra.mxu0 %v1609
        %2065 = vmatpush.bf16.msra.mxu0 %v1607
        %2066 = vmatpush.bf16.msra.mxu0 %v1605
        %2067 = vmatpush.bf16.msra.mxu0 %v1603
        %2068 = vmatpush.bf16.msra.mxu0 %v1601
        %2069 = vmatmul.bf16.gmra.mxu0 %v701
        %v2070 = vpop.f32.mrf.mxu0
        %v2071 = vadd.f32 %v2057, %v2070
        %v2072 = vpop.f32.mrf.mxu0
        %v2073 = vadd.f32 %v2059, %v2072
        %2074 = vdwg.mxu0
        %2075 = vmatpush.bf16.msra.mxu0 %v1631
        %2076 = vmatpush.bf16.msra.mxu0 %v1629
        %2077 = vmatpush.bf16.msra.mxu0 %v1627
        %2078 = vmatpush.bf16.msra.mxu0 %v1625
        %2079 = vmatpush.bf16.msra.mxu0 %v1623
        %2080 = vmatpush.bf16.msra.mxu0 %v1621
        %2081 = vmatpush.bf16.msra.mxu0 %v1619
        %2082 = vmatpush.bf16.msra.mxu0 %v1617
        %2083 = vmatmul.bf16.gmra.mxu0 %v702
        %v2084 = vpop.f32.mrf.mxu0
        %v2085 = vadd.f32 %v2071, %v2084
        %v2086 = vpop.f32.mrf.mxu0
        %v2087 = vadd.f32 %v2073, %v2086
        %2088 = vdwg.mxu0
        %2089 = vmatpush.bf16.msra.mxu0 %v1647
        %2090 = vmatpush.bf16.msra.mxu0 %v1645
        %2091 = vmatpush.bf16.msra.mxu0 %v1643
        %2092 = vmatpush.bf16.msra.mxu0 %v1641
        %2093 = vmatpush.bf16.msra.mxu0 %v1639
        %2094 = vmatpush.bf16.msra.mxu0 %v1637
        %2095 = vmatpush.bf16.msra.mxu0 %v1635
        %2096 = vmatpush.bf16.msra.mxu0 %v1633
        %2097 = vmatmul.bf16.gmra.mxu0 %v703
        %v2098 = vpop.f32.mrf.mxu0
        %v2099 = vadd.f32 %v2085, %v2098
        %v2100 = vpop.f32.mrf.mxu0
        %v2101 = vadd.f32 %v2087, %v2100
        %2102 = vdwg.mxu0
        %2103 = vmatpush.bf16.msra.mxu0 %v1663
        %2104 = vmatpush.bf16.msra.mxu0 %v1661
        %2105 = vmatpush.bf16.msra.mxu0 %v1659
        %2106 = vmatpush.bf16.msra.mxu0 %v1657
        %2107 = vmatpush.bf16.msra.mxu0 %v1655
        %2108 = vmatpush.bf16.msra.mxu0 %v1653
        %2109 = vmatpush.bf16.msra.mxu0 %v1651
        %2110 = vmatpush.bf16.msra.mxu0 %v1649
        %2111 = vmatmul.bf16.gmra.mxu0 %v704
        %v2112 = vpop.f32.mrf.mxu0
        %v2113 = vadd.f32 %v2099, %v2112
        %v2114 = vpop.f32.mrf.mxu0
        %v2115 = vadd.f32 %v2101, %v2114
        %2116 = vdwg.mxu0
        %2117 = vmatpush.bf16.msra.mxu0 %v1679
        %2118 = vmatpush.bf16.msra.mxu0 %v1677
        %2119 = vmatpush.bf16.msra.mxu0 %v1675
        %2120 = vmatpush.bf16.msra.mxu0 %v1673
        %2121 = vmatpush.bf16.msra.mxu0 %v1671
        %2122 = vmatpush.bf16.msra.mxu0 %v1669
        %2123 = vmatpush.bf16.msra.mxu0 %v1667
        %2124 = vmatpush.bf16.msra.mxu0 %v1665
        %2125 = vmatmul.bf16.gmra.mxu0 %v705
        %v2126 = vpop.f32.mrf.mxu0
        %v2127 = vadd.f32 %v2113, %v2126
        %v2128 = vpop.f32.mrf.mxu0
        %v2129 = vadd.f32 %v2115, %v2128
        %2130 = vdwg.mxu0
        %2131 = vmatpush.bf16.msra.mxu0 %v1456
        %2132 = vmatpush.bf16.msra.mxu0 %v1454
        %2133 = vmatpush.bf16.msra.mxu0 %v1452
        %2134 = vmatpush.bf16.msra.mxu0 %v1450
        %2135 = vmatpush.bf16.msra.mxu0 %v1448
        %2136 = vmatpush.bf16.msra.mxu0 %v1446
        %2137 = vmatpush.bf16.msra.mxu0 %v1444
        %2138 = vmatpush.bf16.msra.mxu0 %v1442
        %2139 = vmatmul.bf16.gmra.mxu0 %v691
        %v2140 = vpop.f32.mrf.mxu0
        %v2141 = vadd.f32 %v642, %v2140
        %v2142 = vpop.f32.mrf.mxu0
        %v2143 = vadd.f32 %v642, %v2142
        %2144 = vdwg.mxu0
        %2145 = vmatpush.bf16.msra.mxu0 %v1472
        %2146 = vmatpush.bf16.msra.mxu0 %v1470
        %2147 = vmatpush.bf16.msra.mxu0 %v1468
        %2148 = vmatpush.bf16.msra.mxu0 %v1466
        %2149 = vmatpush.bf16.msra.mxu0 %v1464
        %2150 = vmatpush.bf16.msra.mxu0 %v1462
        %2151 = vmatpush.bf16.msra.mxu0 %v1460
        %2152 = vmatpush.bf16.msra.mxu0 %v1458
        %2153 = vmatmul.bf16.gmra.mxu0 %v692
        %v2154 = vpop.f32.mrf.mxu0
        %v2155 = vadd.f32 %v2141, %v2154
        %v2156 = vpop.f32.mrf.mxu0
        %v2157 = vadd.f32 %v2143, %v2156
        %2158 = vdwg.mxu0
        %2159 = vmatpush.bf16.msra.mxu0 %v1488
        %2160 = vmatpush.bf16.msra.mxu0 %v1486
        %2161 = vmatpush.bf16.msra.mxu0 %v1484
        %2162 = vmatpush.bf16.msra.mxu0 %v1482
        %2163 = vmatpush.bf16.msra.mxu0 %v1480
        %2164 = vmatpush.bf16.msra.mxu0 %v1478
        %2165 = vmatpush.bf16.msra.mxu0 %v1476
        %2166 = vmatpush.bf16.msra.mxu0 %v1474
        %2167 = vmatmul.bf16.gmra.mxu0 %v693
        %v2168 = vpop.f32.mrf.mxu0
        %v2169 = vadd.f32 %v2155, %v2168
        %v2170 = vpop.f32.mrf.mxu0
        %v2171 = vadd.f32 %v2157, %v2170
        %2172 = vdwg.mxu0
        %2173 = vmatpush.bf16.msra.mxu0 %v1504
        %2174 = vmatpush.bf16.msra.mxu0 %v1502
        %2175 = vmatpush.bf16.msra.mxu0 %v1500
        %2176 = vmatpush.bf16.msra.mxu0 %v1498
        %2177 = vmatpush.bf16.msra.mxu0 %v1496
        %2178 = vmatpush.bf16.msra.mxu0 %v1494
        %2179 = vmatpush.bf16.msra.mxu0 %v1492
        %2180 = vmatpush.bf16.msra.mxu0 %v1490
        %2181 = vmatmul.bf16.gmra.mxu0 %v694
        %v2182 = vpop.f32.mrf.mxu0
        %v2183 = vadd.f32 %v2169, %v2182
        %v2184 = vpop.f32.mrf.mxu0
        %v2185 = vadd.f32 %v2171, %v2184
        %2186 = vdwg.mxu0
        %2187 = vmatpush.bf16.msra.mxu0 %v1520
        %2188 = vmatpush.bf16.msra.mxu0 %v1518
        %2189 = vmatpush.bf16.msra.mxu0 %v1516
        %2190 = vmatpush.bf16.msra.mxu0 %v1514
        %2191 = vmatpush.bf16.msra.mxu0 %v1512
        %2192 = vmatpush.bf16.msra.mxu0 %v1510
        %2193 = vmatpush.bf16.msra.mxu0 %v1508
        %2194 = vmatpush.bf16.msra.mxu0 %v1506
        %2195 = vmatmul.bf16.gmra.mxu0 %v695
        %v2196 = vpop.f32.mrf.mxu0
        %v2197 = vadd.f32 %v2183, %v2196
        %v2198 = vpop.f32.mrf.mxu0
        %v2199 = vadd.f32 %v2185, %v2198
        %2200 = vdwg.mxu0
        %2201 = vmatpush.bf16.msra.mxu0 %v1536
        %2202 = vmatpush.bf16.msra.mxu0 %v1534
        %2203 = vmatpush.bf16.msra.mxu0 %v1532
        %2204 = vmatpush.bf16.msra.mxu0 %v1530
        %2205 = vmatpush.bf16.msra.mxu0 %v1528
        %2206 = vmatpush.bf16.msra.mxu0 %v1526
        %2207 = vmatpush.bf16.msra.mxu0 %v1524
        %2208 = vmatpush.bf16.msra.mxu0 %v1522
        %2209 = vmatmul.bf16.gmra.mxu0 %v696
        %v2210 = vpop.f32.mrf.mxu0
        %v2211 = vadd.f32 %v2197, %v2210
        %v2212 = vpop.f32.mrf.mxu0
        %v2213 = vadd.f32 %v2199, %v2212
        %2214 = vdwg.mxu0
        %2215 = vmatpush.bf16.msra.mxu0 %v1552
        %2216 = vmatpush.bf16.msra.mxu0 %v1550
        %2217 = vmatpush.bf16.msra.mxu0 %v1548
        %2218 = vmatpush.bf16.msra.mxu0 %v1546
        %2219 = vmatpush.bf16.msra.mxu0 %v1544
        %2220 = vmatpush.bf16.msra.mxu0 %v1542
        %2221 = vmatpush.bf16.msra.mxu0 %v1540
        %2222 = vmatpush.bf16.msra.mxu0 %v1538
        %2223 = vmatmul.bf16.gmra.mxu0 %v697
        %v2224 = vpop.f32.mrf.mxu0
        %v2225 = vadd.f32 %v2211, %v2224
        %v2226 = vpop.f32.mrf.mxu0
        %v2227 = vadd.f32 %v2213, %v2226
        %2228 = vdwg.mxu0
        %2229 = vmatpush.bf16.msra.mxu0 %v1568
        %2230 = vmatpush.bf16.msra.mxu0 %v1566
        %2231 = vmatpush.bf16.msra.mxu0 %v1564
        %2232 = vmatpush.bf16.msra.mxu0 %v1562
        %2233 = vmatpush.bf16.msra.mxu0 %v1560
        %2234 = vmatpush.bf16.msra.mxu0 %v1558
        %2235 = vmatpush.bf16.msra.mxu0 %v1556
        %2236 = vmatpush.bf16.msra.mxu0 %v1554
        %2237 = vmatmul.bf16.gmra.mxu0 %v698
        %v2238 = vpop.f32.mrf.mxu0
        %v2239 = vadd.f32 %v2225, %v2238
        %v2240 = vpop.f32.mrf.mxu0
        %v2241 = vadd.f32 %v2227, %v2240
        %2242 = vdwg.mxu0
        %2243 = vmatpush.bf16.msra.mxu0 %v1584
        %2244 = vmatpush.bf16.msra.mxu0 %v1582
        %2245 = vmatpush.bf16.msra.mxu0 %v1580
        %2246 = vmatpush.bf16.msra.mxu0 %v1578
        %2247 = vmatpush.bf16.msra.mxu0 %v1576
        %2248 = vmatpush.bf16.msra.mxu0 %v1574
        %2249 = vmatpush.bf16.msra.mxu0 %v1572
        %2250 = vmatpush.bf16.msra.mxu0 %v1570
        %2251 = vmatmul.bf16.gmra.mxu0 %v699
        %v2252 = vpop.f32.mrf.mxu0
        %v2253 = vadd.f32 %v2239, %v2252
        %v2254 = vpop.f32.mrf.mxu0
        %v2255 = vadd.f32 %v2241, %v2254
        %2256 = vdwg.mxu0
        %2257 = vmatpush.bf16.msra.mxu0 %v1600
        %2258 = vmatpush.bf16.msra.mxu0 %v1598
        %2259 = vmatpush.bf16.msra.mxu0 %v1596
        %2260 = vmatpush.bf16.msra.mxu0 %v1594
        %2261 = vmatpush.bf16.msra.mxu0 %v1592
        %2262 = vmatpush.bf16.msra.mxu0 %v1590
        %2263 = vmatpush.bf16.msra.mxu0 %v1588
        %2264 = vmatpush.bf16.msra.mxu0 %v1586
        %2265 = vmatmul.bf16.gmra.mxu0 %v700
        %v2266 = vpop.f32.mrf.mxu0
        %v2267 = vadd.f32 %v2253, %v2266
        %v2268 = vpop.f32.mrf.mxu0
        %v2269 = vadd.f32 %v2255, %v2268
        %2270 = vdwg.mxu0
        %2271 = vmatpush.bf16.msra.mxu0 %v1616
        %2272 = vmatpush.bf16.msra.mxu0 %v1614
        %2273 = vmatpush.bf16.msra.mxu0 %v1612
        %2274 = vmatpush.bf16.msra.mxu0 %v1610
        %2275 = vmatpush.bf16.msra.mxu0 %v1608
        %2276 = vmatpush.bf16.msra.mxu0 %v1606
        %2277 = vmatpush.bf16.msra.mxu0 %v1604
        %2278 = vmatpush.bf16.msra.mxu0 %v1602
        %2279 = vmatmul.bf16.gmra.mxu0 %v701
        %v2280 = vpop.f32.mrf.mxu0
        %v2281 = vadd.f32 %v2267, %v2280
        %v2282 = vpop.f32.mrf.mxu0
        %v2283 = vadd.f32 %v2269, %v2282
        %2284 = vdwg.mxu0
        %2285 = vmatpush.bf16.msra.mxu0 %v1632
        %2286 = vmatpush.bf16.msra.mxu0 %v1630
        %2287 = vmatpush.bf16.msra.mxu0 %v1628
        %2288 = vmatpush.bf16.msra.mxu0 %v1626
        %2289 = vmatpush.bf16.msra.mxu0 %v1624
        %2290 = vmatpush.bf16.msra.mxu0 %v1622
        %2291 = vmatpush.bf16.msra.mxu0 %v1620
        %2292 = vmatpush.bf16.msra.mxu0 %v1618
        %2293 = vmatmul.bf16.gmra.mxu0 %v702
        %v2294 = vpop.f32.mrf.mxu0
        %v2295 = vadd.f32 %v2281, %v2294
        %v2296 = vpop.f32.mrf.mxu0
        %v2297 = vadd.f32 %v2283, %v2296
        %2298 = vdwg.mxu0
        %2299 = vmatpush.bf16.msra.mxu0 %v1648
        %2300 = vmatpush.bf16.msra.mxu0 %v1646
        %2301 = vmatpush.bf16.msra.mxu0 %v1644
        %2302 = vmatpush.bf16.msra.mxu0 %v1642
        %2303 = vmatpush.bf16.msra.mxu0 %v1640
        %2304 = vmatpush.bf16.msra.mxu0 %v1638
        %2305 = vmatpush.bf16.msra.mxu0 %v1636
        %2306 = vmatpush.bf16.msra.mxu0 %v1634
        %2307 = vmatmul.bf16.gmra.mxu0 %v703
        %v2308 = vpop.f32.mrf.mxu0
        %v2309 = vadd.f32 %v2295, %v2308
        %v2310 = vpop.f32.mrf.mxu0
        %v2311 = vadd.f32 %v2297, %v2310
        %2312 = vdwg.mxu0
        %2313 = vmatpush.bf16.msra.mxu0 %v1664
        %2314 = vmatpush.bf16.msra.mxu0 %v1662
        %2315 = vmatpush.bf16.msra.mxu0 %v1660
        %2316 = vmatpush.bf16.msra.mxu0 %v1658
        %2317 = vmatpush.bf16.msra.mxu0 %v1656
        %2318 = vmatpush.bf16.msra.mxu0 %v1654
        %2319 = vmatpush.bf16.msra.mxu0 %v1652
        %2320 = vmatpush.bf16.msra.mxu0 %v1650
        %2321 = vmatmul.bf16.gmra.mxu0 %v704
        %v2322 = vpop.f32.mrf.mxu0
        %v2323 = vadd.f32 %v2309, %v2322
        %v2324 = vpop.f32.mrf.mxu0
        %v2325 = vadd.f32 %v2311, %v2324
        %2326 = vdwg.mxu0
        %2327 = vmatpush.bf16.msra.mxu0 %v1680
        %2328 = vmatpush.bf16.msra.mxu0 %v1678
        %2329 = vmatpush.bf16.msra.mxu0 %v1676
        %2330 = vmatpush.bf16.msra.mxu0 %v1674
        %2331 = vmatpush.bf16.msra.mxu0 %v1672
        %2332 = vmatpush.bf16.msra.mxu0 %v1670
        %2333 = vmatpush.bf16.msra.mxu0 %v1668
        %2334 = vmatpush.bf16.msra.mxu0 %v1666
        %2335 = vmatmul.bf16.gmra.mxu0 %v705
        %v2336 = vpop.f32.mrf.mxu0
        %v2337 = vadd.f32 %v2323, %v2336
        %v2338 = vpop.f32.mrf.mxu0
        %v2339 = vadd.f32 %v2325, %v2338
        %2340 = vdwg.mxu0
        %v2341 = vmax.f32 %v2127, 0.0
        %v2342 = vmax.f32 %v2337, 0.0
        %v2343 = vmax.f32 %v2129, 0.0
        %v2344 = vmax.f32 %v2339, 0.0
        %v2345 = vpack.c.bf16 %v2342, %v2341
        %v2346 = vpack.c.bf16 %v2344, %v2343
        %v2347 = vld [vmem:[%s326] sm:$0xf]
        %v2348 = vld [vmem:[%s326 + $0x4] sm:$0xf]
        %v2349 = vld [vmem:[%s326 + $0x8] sm:$0xf]
        %v2350 = vld [vmem:[%s326 + $0xc] sm:$0xf]
        %v2351 = vld [vmem:[%s326 + $0x10] sm:$0xf]
        %v2352 = vld [vmem:[%s326 + $0x14] sm:$0xf]
        %v2353 = vld [vmem:[%s326 + $0x18] sm:$0xf]
        %v2354 = vld [vmem:[%s326 + $0x1c] sm:$0xf]
        %v2355 = vld [vmem:[%s326 + $0x20] sm:$0xf]
        %v2356 = vld [vmem:[%s326 + $0x24] sm:$0xf]
        %v2357 = vld [vmem:[%s326 + $0x28] sm:$0xf]
        %v2358 = vld [vmem:[%s326 + $0x2c] sm:$0xf]
        %v2359 = vld [vmem:[%s326 + $0x30] sm:$0xf]
        %v2360 = vld [vmem:[%s326 + $0x34] sm:$0xf]
        %v2361 = vld [vmem:[%s326 + $0x38] sm:$0xf]
        %v2362 = vld [vmem:[%s326 + $0x3c] sm:$0xf]
        %v2363 = vld [vmem:[%s336] sm:$0x1]
        %v2365 = vperm.slane %v2363, 0
        %v2369 = vunpack.c.l.b16 %v2345
        %v2370 = vunpack.c.l.b16 %v2346
        %v2371 = vpack.c.b16 %v2370, %v2369
        %v2389 = vunpack.c.l.b16 %v2347
        %v2390 = vunpack.c.l.b16 %v2348
        %v2391 = vunpack.c.l.b16 %v2349
        %v2392 = vunpack.c.l.b16 %v2350
        %v2393 = vunpack.c.l.b16 %v2351
        %v2394 = vunpack.c.l.b16 %v2352
        %v2395 = vunpack.c.l.b16 %v2353
        %v2396 = vunpack.c.l.b16 %v2354
        %v2397 = vunpack.c.l.b16 %v2355
        %v2398 = vunpack.c.l.b16 %v2356
        %v2399 = vunpack.c.l.b16 %v2357
        %v2400 = vunpack.c.l.b16 %v2358
        %v2401 = vunpack.c.l.b16 %v2359
        %v2402 = vunpack.c.l.b16 %v2360
        %v2403 = vunpack.c.l.b16 %v2361
        %v2404 = vunpack.c.l.b16 %v2362
        %v2405 = vpack.c.b16 %v2390, %v2389
        %v2406 = vpack.c.b16 %v2392, %v2391
        %v2407 = vpack.c.b16 %v2394, %v2393
        %v2408 = vpack.c.b16 %v2396, %v2395
        %v2409 = vpack.c.b16 %v2398, %v2397
        %v2410 = vpack.c.b16 %v2400, %v2399
        %v2411 = vpack.c.b16 %v2402, %v2401
        %v2412 = vpack.c.b16 %v2404, %v2403
        %2421 = vmatpush.bf16.msra.mxu0 %v2412
        %2422 = vmatpush.bf16.msra.mxu0 %v2411
        %2423 = vmatpush.bf16.msra.mxu0 %v2410
        %2424 = vmatpush.bf16.msra.mxu0 %v2409
        %2425 = vmatpush.bf16.msra.mxu0 %v2408
        %2426 = vmatpush.bf16.msra.mxu0 %v2407
        %2427 = vmatpush.bf16.msra.mxu0 %v2406
        %2428 = vmatpush.bf16.msra.mxu0 %v2405
        %2429 = vmatmul.bf16.gmra.mxu0 %v2371
        %v2430 = vpop.f32.mrf.mxu0
        %v2431 = vadd.f32 %v2365, %v2430
        %v2432 = vpop.f32.mrf.mxu0
        %v2433 = vadd.f32 %v2365, %v2432
        %2434 = vdwg.mxu0
        %2435 = vst [vmem:[%s378] sm:$0xff] %v2431
        %2436 = vst [vmem:[%s378 + $0x10] sm:$0xff] %v2433
        %s2437 = scalar_lea.vmem %s326, 64 [#allocation8]
        %v2438 = vld [vmem:[%s2437] sm:$0xf]
        %v2439 = vld [vmem:[%s2437 + $0x4] sm:$0xf]
        %v2440 = vld [vmem:[%s2437 + $0x8] sm:$0xf]
        %v2441 = vld [vmem:[%s2437 + $0xc] sm:$0xf]
        %v2442 = vld [vmem:[%s2437 + $0x10] sm:$0xf]
        %v2443 = vld [vmem:[%s2437 + $0x14] sm:$0xf]
        %v2444 = vld [vmem:[%s2437 + $0x18] sm:$0xf]
        %v2445 = vld [vmem:[%s2437 + $0x1c] sm:$0xf]
        %v2446 = vld [vmem:[%s2437 + $0x20] sm:$0xf]
        %v2447 = vld [vmem:[%s2437 + $0x24] sm:$0xf]
        %v2448 = vld [vmem:[%s2437 + $0x28] sm:$0xf]
        %v2449 = vld [vmem:[%s2437 + $0x2c] sm:$0xf]
        %v2450 = vld [vmem:[%s2437 + $0x30] sm:$0xf]
        %v2451 = vld [vmem:[%s2437 + $0x34] sm:$0xf]
        %v2452 = vld [vmem:[%s2437 + $0x38] sm:$0xf]
        %v2453 = vld [vmem:[%s2437 + $0x3c] sm:$0xf]
        %s2454 = scalar_lea.vmem %s336, 1 [#allocation10]
        %v2455 = vld [vmem:[%s2454] sm:$0x1]
        %v2457 = vperm.slane %v2455, 0
        %v2459 = vunpack.c.h.b16 %v2345
        %v2460 = vunpack.c.h.b16 %v2346
        %v2461 = vpack.c.b16 %v2460, %v2459
        %v2479 = vunpack.c.l.b16 %v2438
        %v2480 = vunpack.c.l.b16 %v2439
        %v2481 = vunpack.c.l.b16 %v2440
        %v2482 = vunpack.c.l.b16 %v2441
        %v2483 = vunpack.c.l.b16 %v2442
        %v2484 = vunpack.c.l.b16 %v2443
        %v2485 = vunpack.c.l.b16 %v2444
        %v2486 = vunpack.c.l.b16 %v2445
        %v2487 = vunpack.c.l.b16 %v2446
        %v2488 = vunpack.c.l.b16 %v2447
        %v2489 = vunpack.c.l.b16 %v2448
        %v2490 = vunpack.c.l.b16 %v2449
        %v2491 = vunpack.c.l.b16 %v2450
        %v2492 = vunpack.c.l.b16 %v2451
        %v2493 = vunpack.c.l.b16 %v2452
        %v2494 = vunpack.c.l.b16 %v2453
        %v2495 = vpack.c.b16 %v2480, %v2479
        %v2496 = vpack.c.b16 %v2482, %v2481
        %v2497 = vpack.c.b16 %v2484, %v2483
        %v2498 = vpack.c.b16 %v2486, %v2485
        %v2499 = vpack.c.b16 %v2488, %v2487
        %v2500 = vpack.c.b16 %v2490, %v2489
        %v2501 = vpack.c.b16 %v2492, %v2491
        %v2502 = vpack.c.b16 %v2494, %v2493
        %2511 = vmatpush.bf16.msra.mxu0 %v2502
        %2512 = vmatpush.bf16.msra.mxu0 %v2501
        %2513 = vmatpush.bf16.msra.mxu0 %v2500
        %2514 = vmatpush.bf16.msra.mxu0 %v2499
        %2515 = vmatpush.bf16.msra.mxu0 %v2498
        %2516 = vmatpush.bf16.msra.mxu0 %v2497
        %2517 = vmatpush.bf16.msra.mxu0 %v2496
        %2518 = vmatpush.bf16.msra.mxu0 %v2495
        %2519 = vmatmul.bf16.gmra.mxu0 %v2461
        %v2520 = vpop.f32.mrf.mxu0
        %v2521 = vadd.f32 %v2457, %v2520
        %v2522 = vpop.f32.mrf.mxu0
        %v2523 = vadd.f32 %v2457, %v2522
        %2524 = vdwg.mxu0
        %2525 = vst [vmem:[%s378 + $0x8] sm:$0xff] %v2521
        %2526 = vst [vmem:[%s378 + $0x18] sm:$0xff] %v2523
        %s2527 = sand.u32 %s159, 1
        %s2528 = scalar_lea.sflag [#allocation4], %s2527
        %s2529 = sand.u32 %s159, 1
        %s2530 = smul.addr %s2529, 32
        %s2531 = scalar_lea.vmem [#allocation11], %s2530
        // Predicated region
        $region61: #{tpu_custom_call.1} parent=39 // pred_check
          %p2532 = pneg %p169
        $region62: #{tpu_custom_call.1} parent=39 // pred_check_branch
          %2534 = sbr.rel (%p2532) target = $region64
        $region63: #{tpu_custom_call.1} parent=39 // pred_region
          %s2535 = smul.u32 2, %s26
          %2537 = vsyncadd %s2528, 0
          %s2538 = smul.addr %s2535, 8
          %s2539 = scalar_lea.hbm %s5, %s2538
          %s2540 = sshll.u32 %s2531, 4
          %s2541 = int_to_ptr.vmem [resolvable:$true] %s2540
          %s2542 = sshll.u32 %s2539, 4
          %s2543 = int_to_ptr.hbm [resolvable:$true] %s2542
          %2548 = dma.vmem_to_hbm [thread:$0]  %s2541, 512, %s2543, %s2528, 256, 512, 16
        $region64: #{tpu_custom_call.1} parent=39 // pred_fallthru
          _
      $region40: #{tpu_custom_call.1} parent=5 // pred_fallthru
        _
      %p2549 = scmp.le.s32.totalorder 2, %s21
      // Predicated region
      $region65: #{tpu_custom_call.1} parent=5 // pred_check
        %p2550 = pneg %p2549
      $region66: #{tpu_custom_call.1} parent=5 // pred_check_branch
        %2552 = sbr.rel (%p2550) target = $region68
      $region67: #{tpu_custom_call.1} parent=5 // pred_region
        %s2553 = ssub.s32 %s21, 2
        // Predicated region
        $region69: #{tpu_custom_call.1} parent=67 // pred_check
          %p2554 = pneg %p175
        $region70: #{tpu_custom_call.1} parent=67 // pred_check_branch
          %2556 = sbr.rel (%p2554) target = $region72
        $region71: #{tpu_custom_call.1} parent=67 // pred_region
          %s2557 = sand.u32 %s160, 1
          %s2558 = scalar_lea.sflag [#allocation4], %s2557
          %s2559 = sand.u32 %s160, 1
          %s2560 = smul.addr %s2559, 32
          %s2561 = scalar_lea.vmem [#allocation11], %s2560
          %2563 = dma.done %s2558, 512
        $region72: #{tpu_custom_call.1} parent=67 // pred_fallthru
          _
      $region68: #{tpu_custom_call.1} parent=5 // pred_fallthru
        _
    $region6: #{tpu_custom_call.1} parent=1 // loop_footer
      %s25 = sadd.s32 1, %s21
    $region7: #{tpu_custom_call.1} parent=1 // loop_footer_branch
      %20 = sbr.rel target = $region3
    $region8: #{tpu_custom_call.1} parent=1 // loop_exit
      _
    %2564 = vsyncpa [#allocation3], 1
    %s2565 = scalar_lea.sflag [#allocation3], 1
    %2566 = vsyncpa %s2565, 1
    %2567 = vsyncpa [#allocation6], 1
    %s2568 = scalar_lea.sflag [#allocation6], 1
    %2569 = vsyncpa %s2568, 1
    %2570 = vsyncpa [#allocation9], 1
    %s2571 = scalar_lea.sflag [#allocation9], 1
    %2572 = vsyncpa %s2571, 1
    %2573 = vsyncpa [#allocation4], 1
    %s2574 = scalar_lea.sflag [#allocation4], 1
    %2575 = vsyncpa %s2574, 1

</llo_original>
